<compile_context>
chip_gen: v5e
topology: v5e:2x2
jax: 0.10.0
libtpu: 0.0.40
codegen_flags: <defaults>
</compile_context>

<pallas_src>
import functools

import jax
import jax.numpy as jnp
from jax.experimental import pallas as pl
from jax.experimental.pallas import tpu as pltpu


_MXU_DTYPE = jnp.bfloat16   # MXU-input dtype (accumulation is f32). Set to jnp.float32 to disable.
_K = 3                      # TAGConv hops
_SIGMA = 0.5                # AE/GCN mixing coefficient


# ----------------------------------------------------------------------------
# Fused forward kernel
# ----------------------------------------------------------------------------
def _dcmbs_kernel(
        # data
        x_ref, adj_ref,
        # AE encoder / decoder (weight, bias) pairs
        we1, be1, we2, be2, we3, be3, wz, bz,
        wd1, bd1, wd2, bd2, wd3, bd3, wxb, bxb,
        # TAGConv stack (stacked weight, bias) pairs
        wt1, bt1, wt2, bt2, wt3, bt3, wt4, bt4, wt5, bt5,
        # clustering centers
        clus_ref,
        # outputs
        xbar_ref, q_ref, pred_ref, z_ref,
        *, K, sigma, v):

    def mm(a, b):
        # bf16 MXU inputs, f32 accumulate; elementwise math around it stays f32.
        return jnp.dot(a.astype(_MXU_DTYPE), b.astype(_MXU_DTYPE),
                       preferred_element_type=jnp.float32)

    def dense(h, w_ref, b_ref, relu):
        y = mm(h, w_ref[...]) + b_ref[...]
        return jnp.maximum(y, 0.0) if relu else y

    x = x_ref[...]
    adj = adj_ref[...].astype(_MXU_DTYPE)   # load + cast once, reused by all 5 TAGConv layers

    def tagconv(h_in, w_ref, b_ref):
        n_in, n_out = w_ref.shape[1], w_ref.shape[2]
        if n_out < n_in:
            # Horner form: adj matmuls run at the narrower width n_out.
            s = [mm(h_in, w_ref[k]) for k in range(K + 1)]
            acc = s[K]
            for k in range(K - 1, -1, -1):
                acc = s[k] + mm(adj, acc)
        else:
            # Standard order: adj matmuls run at width n_in (<= n_out here).
            h = h_in
            acc = mm(h, w_ref[0])
            for k in range(1, K + 1):
                h = mm(adj, h)
                acc = acc + mm(h, w_ref[k])
        return acc + b_ref[...]

    # ---- AE branch ----
    e1 = dense(x, we1, be1, relu=True)
    e2 = dense(e1, we2, be2, relu=True)
    e3 = dense(e2, we3, be3, relu=True)
    z = dense(e3, wz, bz, relu=False)
    dd1 = dense(z, wd1, bd1, relu=True)
    dd2 = dense(dd1, wd2, bd2, relu=True)
    dd3 = dense(dd2, wd3, bd3, relu=True)
    xbar_ref[...] = dense(dd3, wxb, bxb, relu=False)
    z_ref[...] = z

    # ---- GCN branch (TAGConv stack with sigma-mixing of AE activations) ----
    h = tagconv(x, wt1, bt1)
    h = tagconv((1.0 - sigma) * h + sigma * e1, wt2, bt2)
    h = tagconv((1.0 - sigma) * h + sigma * e2, wt3, bt3)
    h = tagconv((1.0 - sigma) * h + sigma * e3, wt4, bt4)
    h = tagconv((1.0 - sigma) * h + sigma * z, wt5, bt5)

    # softmax over dim=1 (features)
    m = jnp.max(h, axis=1, keepdims=True)
    e = jnp.exp(h - m)
    pred_ref[...] = e * pl.reciprocal(jnp.sum(e, axis=1, keepdims=True), approx=True)

    # ---- t-student cluster assignment: ||z - c||^2 via matmul identity ----
    c = clus_ref[...]
    zc = jnp.einsum('nd,kd->nk', z.astype(_MXU_DTYPE), c.astype(_MXU_DTYPE),
                    preferred_element_type=jnp.float32)                  # (N, n_clusters)
    z_sq = jnp.sum(z * z, axis=1, keepdims=True)                         # (N, 1)
    # (1, n_clusters) row of ||c||^2 computed as a tiny matmul (no transpose needed)
    c_sq_row = jnp.einsum('od,kd->ok', jnp.ones((1, c.shape[1]), jnp.float32), c * c,
                          preferred_element_type=jnp.float32)            # (1, n_clusters)
    dist2 = jnp.maximum(z_sq + c_sq_row - 2.0 * zc, 0.0)
    qv = 1.0 / (1.0 + dist2 * (1.0 / v))
    if v != 1.0:  # exponent is exactly 1.0 for the default v=1 -> skip the pow at trace time
        qv = qv ** ((v + 1.0) / 2.0)
    q_ref[...] = qv * pl.reciprocal(jnp.sum(qv, axis=1, keepdims=True), approx=True)


# ----------------------------------------------------------------------------
# pallas_call wrapper (single fused kernel, whole arrays resident in VMEM)
# ----------------------------------------------------------------------------
def _full_spec(shape):
    return pl.BlockSpec(shape, lambda *_: (0,) * len(shape))


def dcmbs_forward(x, adj, params, v=1.0):
    N, n_input = x.shape
    n_clusters = params["cluster"].shape[0]
    n_z = params["z_layer"][0].shape[1]

    args = [
        x, adj,
        *params["enc_1"], *params["enc_2"], *params["enc_3"], *params["z_layer"],
        *params["dec_1"], *params["dec_2"], *params["dec_3"], *params["x_bar"],
        *params["tag1"], *params["tag2"], *params["tag3"], *params["tag4"], *params["tag5"],
        params["cluster"],
    ]
    out_shapes = (
        jax.ShapeDtypeStruct((N, n_input), jnp.float32),      # x_bar
        jax.ShapeDtypeStruct((N, n_clusters), jnp.float32),   # q
        jax.ShapeDtypeStruct((N, n_clusters), jnp.float32),   # predict
        jax.ShapeDtypeStruct((N, n_z), jnp.float32),          # z
    )
    kernel = functools.partial(_dcmbs_kernel, K=_K, sigma=_SIGMA, v=float(v))
    return pl.pallas_call(
        kernel,
        out_shape=out_shapes,
        grid=(1,),
        in_specs=[_full_spec(a.shape) for a in args],
        out_specs=tuple(_full_spec(s.shape) for s in out_shapes),
        compiler_params=pltpu.CompilerParams(
            dimension_semantics=("arbitrary",)),
    )(*args)
    # TODO(synk): if N / feature dims are scaled up, add a "parallel" node-row
    # grid axis and tile adj (smaller tiles on v7x, 64 MiB VMEM) instead of the
    # single full-array block used here for the toy shapes.


# ----------------------------------------------------------------------------
# Deterministic parameter init (synthetic; replaces torch.load of pretrained AE)
# ----------------------------------------------------------------------------
def _linear_params(key, n_in, n_out):
    kw, kb = jax.random.split(key)
    scale = jnp.sqrt(2.0 / (n_in + n_out)).astype(jnp.float32)
    w = scale * jax.random.normal(kw, (n_in, n_out), jnp.float32)
    b = 0.01 * jax.random.normal(kb, (1, n_out), jnp.float32)
    return w, b


def _tagconv_params(key, n_in, n_out, K=_K):
    kw, kb = jax.random.split(key)
    scale = jnp.sqrt(2.0 / ((K + 1) * n_in + n_out)).astype(jnp.float32)
    w = scale * jax.random.normal(kw, (K + 1, n_in, n_out), jnp.float32)
    b = 0.01 * jax.random.normal(kb, (1, n_out), jnp.float32)
    return w, b


def make_params(key, n_enc_1, n_enc_2, n_enc_3, n_dec_1, n_dec_2, n_dec_3,
                n_input, n_z, n_clusters):
    keys = jax.random.split(key, 16)
    return {
        "enc_1": _linear_params(keys[0], n_input, n_enc_1),
        "enc_2": _linear_params(keys[1], n_enc_1, n_enc_2),
        "enc_3": _linear_params(keys[2], n_enc_2, n_enc_3),
        "z_layer": _linear_params(keys[3], n_enc_3, n_z),
        "dec_1": _linear_params(keys[4], n_z, n_dec_1),
        "dec_2": _linear_params(keys[5], n_dec_1, n_dec_2),
        "dec_3": _linear_params(keys[6], n_dec_2, n_dec_3),
        "x_bar": _linear_params(keys[7], n_dec_3, n_input),
        "tag1": _tagconv_params(keys[8], n_input, n_enc_1),
        "tag2": _tagconv_params(keys[9], n_enc_1, n_enc_2),
        "tag3": _tagconv_params(keys[10], n_enc_2, n_enc_3),
        "tag4": _tagconv_params(keys[11], n_enc_3, n_z),
        "tag5": _tagconv_params(keys[12], n_z, n_clusters),
        # xavier_normal_ for cluster_layer: std = sqrt(2/(n_clusters+n_z))
        "cluster": jnp.sqrt(2.0 / (n_clusters + n_z)).astype(jnp.float32)
                   * jax.random.normal(keys[13], (n_clusters, n_z), jnp.float32),
    }


if __name__ == "__main__":
    # small, consistent shapes
    N = 16          # number of graph nodes / samples
    n_input = 32
    n_enc_1, n_enc_2, n_enc_3 = 64, 64, 32
    n_dec_1, n_dec_2, n_dec_3 = 32, 64, 64
    n_z = 16
    n_clusters = 4

    key = jax.random.PRNGKey(0)
    k_x, k_a, k_p = jax.random.split(key, 3)

    x = jax.random.normal(k_x, (N, n_input), jnp.float32)

    # deterministic symmetric adjacency with self-loops, row-normalized
    a = (jax.random.uniform(k_a, (N, N)) > 0.7).astype(jnp.float32)
    a = jnp.maximum(a, a.T) + jnp.eye(N, dtype=jnp.float32)
    adj = a / jnp.sum(a, axis=1, keepdims=True)

    params = make_params(k_p, n_enc_1, n_enc_2, n_enc_3,
                         n_dec_1, n_dec_2, n_dec_3, n_input, n_z, n_clusters)

    fwd = jax.jit(functools.partial(dcmbs_forward, v=1.0))
    x_bar, q, predict, z = fwd(x, adj, params)
    jax.block_until_ready((x_bar, q, predict, z))

    # sanity checks
    assert x_bar.shape == (N, n_input)
    assert q.shape == (N, n_clusters)
    assert predict.shape == (N, n_clusters)
    assert z.shape == (N, n_z)
    assert bool(jnp.isfinite(x_bar).all())
    assert bool(jnp.isfinite(z).all())
    assert bool(jnp.isfinite(q).all()) and bool(jnp.isfinite(predict).all())
    assert bool(jnp.all(jnp.abs(jnp.sum(q, axis=1) - 1.0) < 1e-2))
    assert bool(jnp.all(jnp.abs(jnp.sum(predict, axis=1) - 1.0) < 1e-2))

    print("KERNEL_OK")
</pallas_src>

<mosaic_0001>
module attributes {stable_mosaic.version = 11 : i64} {
  func.func @_dcmbs_kernel(%arg0: i32, %arg1: memref<16x32xf32, #tpu.memory_space<vmem>>, %arg2: memref<16x16xf32, #tpu.memory_space<vmem>>, %arg3: memref<32x64xf32, #tpu.memory_space<vmem>>, %arg4: memref<1x64xf32, #tpu.memory_space<vmem>>, %arg5: memref<64x64xf32, #tpu.memory_space<vmem>>, %arg6: memref<1x64xf32, #tpu.memory_space<vmem>>, %arg7: memref<64x32xf32, #tpu.memory_space<vmem>>, %arg8: memref<1x32xf32, #tpu.memory_space<vmem>>, %arg9: memref<32x16xf32, #tpu.memory_space<vmem>>, %arg10: memref<1x16xf32, #tpu.memory_space<vmem>>, %arg11: memref<16x32xf32, #tpu.memory_space<vmem>>, %arg12: memref<1x32xf32, #tpu.memory_space<vmem>>, %arg13: memref<32x64xf32, #tpu.memory_space<vmem>>, %arg14: memref<1x64xf32, #tpu.memory_space<vmem>>, %arg15: memref<64x64xf32, #tpu.memory_space<vmem>>, %arg16: memref<1x64xf32, #tpu.memory_space<vmem>>, %arg17: memref<64x32xf32, #tpu.memory_space<vmem>>, %arg18: memref<1x32xf32, #tpu.memory_space<vmem>>, %arg19: memref<4x32x64xf32, #tpu.memory_space<vmem>>, %arg20: memref<1x64xf32, #tpu.memory_space<vmem>>, %arg21: memref<4x64x64xf32, #tpu.memory_space<vmem>>, %arg22: memref<1x64xf32, #tpu.memory_space<vmem>>, %arg23: memref<4x64x32xf32, #tpu.memory_space<vmem>>, %arg24: memref<1x32xf32, #tpu.memory_space<vmem>>, %arg25: memref<4x32x16xf32, #tpu.memory_space<vmem>>, %arg26: memref<1x16xf32, #tpu.memory_space<vmem>>, %arg27: memref<4x16x4xf32, #tpu.memory_space<vmem>>, %arg28: memref<1x4xf32, #tpu.memory_space<vmem>>, %arg29: memref<4x16xf32, #tpu.memory_space<vmem>>, %arg30: memref<16x32xf32, #tpu.memory_space<vmem>>, %arg31: memref<16x4xf32, #tpu.memory_space<vmem>>, %arg32: memref<16x4xf32, #tpu.memory_space<vmem>>, %arg33: memref<16x16xf32, #tpu.memory_space<vmem>>) attributes {dimension_semantics = [#tpu.dimension_semantics<arbitrary>], iteration_bounds = array<i64: 1>, scalar_prefetch = 0 : i64, scratch_operands = 0 : i64, tpu.core_type = #tpu.core_type<tc>, window_params = [{pipeline_mode = #tpu.pipeline_mode<synchronous>, transform_indices = @transform_0, window_bounds = array<i64: 16, 32>}, {pipeline_mode = #tpu.pipeline_mode<synchronous>, transform_indices = @transform_1, window_bounds = array<i64: 16, 16>}, {pipeline_mode = #tpu.pipeline_mode<synchronous>, transform_indices = @transform_2, window_bounds = array<i64: 32, 64>}, {pipeline_mode = #tpu.pipeline_mode<synchronous>, transform_indices = @transform_3, window_bounds = array<i64: 1, 64>}, {pipeline_mode = #tpu.pipeline_mode<synchronous>, transform_indices = @transform_4, window_bounds = array<i64: 64, 64>}, {pipeline_mode = #tpu.pipeline_mode<synchronous>, transform_indices = @transform_5, window_bounds = array<i64: 1, 64>}, {pipeline_mode = #tpu.pipeline_mode<synchronous>, transform_indices = @transform_6, window_bounds = array<i64: 64, 32>}, {pipeline_mode = #tpu.pipeline_mode<synchronous>, transform_indices = @transform_7, window_bounds = array<i64: 1, 32>}, {pipeline_mode = #tpu.pipeline_mode<synchronous>, transform_indices = @transform_8, window_bounds = array<i64: 32, 16>}, {pipeline_mode = #tpu.pipeline_mode<synchronous>, transform_indices = @transform_9, window_bounds = array<i64: 1, 16>}, {pipeline_mode = #tpu.pipeline_mode<synchronous>, transform_indices = @transform_10, window_bounds = array<i64: 16, 32>}, {pipeline_mode = #tpu.pipeline_mode<synchronous>, transform_indices = @transform_11, window_bounds = array<i64: 1, 32>}, {pipeline_mode = #tpu.pipeline_mode<synchronous>, transform_indices = @transform_12, window_bounds = array<i64: 32, 64>}, {pipeline_mode = #tpu.pipeline_mode<synchronous>, transform_indices = @transform_13, window_bounds = array<i64: 1, 64>}, {pipeline_mode = #tpu.pipeline_mode<synchronous>, transform_indices = @transform_14, window_bounds = array<i64: 64, 64>}, {pipeline_mode = #tpu.pipeline_mode<synchronous>, transform_indices = @transform_15, window_bounds = array<i64: 1, 64>}, {pipeline_mode = #tpu.pipeline_mode<synchronous>, transform_indices = @transform_16, window_bounds = array<i64: 64, 32>}, {pipeline_mode = #tpu.pipeline_mode<synchronous>, transform_indices = @transform_17, window_bounds = array<i64: 1, 32>}, {pipeline_mode = #tpu.pipeline_mode<synchronous>, transform_indices = @transform_18, window_bounds = array<i64: 4, 32, 64>}, {pipeline_mode = #tpu.pipeline_mode<synchronous>, transform_indices = @transform_19, window_bounds = array<i64: 1, 64>}, {pipeline_mode = #tpu.pipeline_mode<synchronous>, transform_indices = @transform_20, window_bounds = array<i64: 4, 64, 64>}, {pipeline_mode = #tpu.pipeline_mode<synchronous>, transform_indices = @transform_21, window_bounds = array<i64: 1, 64>}, {pipeline_mode = #tpu.pipeline_mode<synchronous>, transform_indices = @transform_22, window_bounds = array<i64: 4, 64, 32>}, {pipeline_mode = #tpu.pipeline_mode<synchronous>, transform_indices = @transform_23, window_bounds = array<i64: 1, 32>}, {pipeline_mode = #tpu.pipeline_mode<synchronous>, transform_indices = @transform_24, window_bounds = array<i64: 4, 32, 16>}, {pipeline_mode = #tpu.pipeline_mode<synchronous>, transform_indices = @transform_25, window_bounds = array<i64: 1, 16>}, {pipeline_mode = #tpu.pipeline_mode<synchronous>, transform_indices = @transform_26, window_bounds = array<i64: 4, 16, 4>}, {pipeline_mode = #tpu.pipeline_mode<synchronous>, transform_indices = @transform_27, window_bounds = array<i64: 1, 4>}, {pipeline_mode = #tpu.pipeline_mode<synchronous>, transform_indices = @transform_28, window_bounds = array<i64: 4, 16>}, {pipeline_mode = #tpu.pipeline_mode<synchronous>, transform_indices = @transform_29, window_bounds = array<i64: 16, 32>}, {pipeline_mode = #tpu.pipeline_mode<synchronous>, transform_indices = @transform_30, window_bounds = array<i64: 16, 4>}, {pipeline_mode = #tpu.pipeline_mode<synchronous>, transform_indices = @transform_31, window_bounds = array<i64: 16, 4>}, {pipeline_mode = #tpu.pipeline_mode<synchronous>, transform_indices = @transform_32, window_bounds = array<i64: 16, 16>}]} {
    %c0 = arith.constant 0 : index
    %c0_0 = arith.constant 0 : index
    %0 = vector.load %arg1[%c0, %c0_0] : memref<16x32xf32, #tpu.memory_space<vmem>>, vector<16x32xf32>
    %c0_1 = arith.constant 0 : index
    %c0_2 = arith.constant 0 : index
    %1 = vector.load %arg2[%c0_1, %c0_2] : memref<16x16xf32, #tpu.memory_space<vmem>>, vector<16x16xf32>
    %2 = arith.truncf %1 : vector<16x16xf32> to vector<16x16xbf16>
    %c0_3 = arith.constant 0 : index
    %c0_4 = arith.constant 0 : index
    %3 = vector.load %arg3[%c0_3, %c0_4] : memref<32x64xf32, #tpu.memory_space<vmem>>, vector<32x64xf32>
    %4 = arith.truncf %0 : vector<16x32xf32> to vector<16x32xbf16>
    %5 = arith.truncf %3 : vector<32x64xf32> to vector<32x64xbf16>
    %cst = arith.constant dense<0.000000e+00> : vector<16x64xf32>
    %6 = tpu.matmul %4, %5, %cst {dimension_numbers = #tpu.dot_dimension_numbers<[1], [0], [0], [1], [0, 0, 1, 1], [], []>} : vector<16x32xbf16>, vector<32x64xbf16>, vector<16x64xf32> -> vector<16x64xf32>
    %c0_5 = arith.constant 0 : index
    %c0_6 = arith.constant 0 : index
    %7 = vector.load %arg4[%c0_5, %c0_6] : memref<1x64xf32, #tpu.memory_space<vmem>>, vector<1x64xf32>
    %8 = vector.broadcast %7 : vector<1x64xf32> to vector<16x64xf32>
    %9 = arith.addf %6, %8 : vector<16x64xf32>
    %cst_7 = arith.constant 0.000000e+00 : f32
    %10 = vector.broadcast %cst_7 : f32 to vector<16x64xf32>
    %11 = arith.maximumf %9, %10 : vector<16x64xf32>
    %c0_8 = arith.constant 0 : index
    %c0_9 = arith.constant 0 : index
    %12 = vector.load %arg5[%c0_8, %c0_9] : memref<64x64xf32, #tpu.memory_space<vmem>>, vector<64x64xf32>
    %13 = arith.truncf %11 : vector<16x64xf32> to vector<16x64xbf16>
    %14 = arith.truncf %12 : vector<64x64xf32> to vector<64x64xbf16>
    %cst_10 = arith.constant dense<0.000000e+00> : vector<16x64xf32>
    %15 = tpu.matmul %13, %14, %cst_10 {dimension_numbers = #tpu.dot_dimension_numbers<[1], [0], [0], [1], [0, 0, 1, 1], [], []>} : vector<16x64xbf16>, vector<64x64xbf16>, vector<16x64xf32> -> vector<16x64xf32>
    %c0_11 = arith.constant 0 : index
    %c0_12 = arith.constant 0 : index
    %16 = vector.load %arg6[%c0_11, %c0_12] : memref<1x64xf32, #tpu.memory_space<vmem>>, vector<1x64xf32>
    %17 = vector.broadcast %16 : vector<1x64xf32> to vector<16x64xf32>
    %18 = arith.addf %15, %17 : vector<16x64xf32>
    %cst_13 = arith.constant 0.000000e+00 : f32
    %19 = vector.broadcast %cst_13 : f32 to vector<16x64xf32>
    %20 = arith.maximumf %18, %19 : vector<16x64xf32>
    %c0_14 = arith.constant 0 : index
    %c0_15 = arith.constant 0 : index
    %21 = vector.load %arg7[%c0_14, %c0_15] : memref<64x32xf32, #tpu.memory_space<vmem>>, vector<64x32xf32>
    %22 = arith.truncf %20 : vector<16x64xf32> to vector<16x64xbf16>
    %23 = arith.truncf %21 : vector<64x32xf32> to vector<64x32xbf16>
    %cst_16 = arith.constant dense<0.000000e+00> : vector<16x32xf32>
    %24 = tpu.matmul %22, %23, %cst_16 {dimension_numbers = #tpu.dot_dimension_numbers<[1], [0], [0], [1], [0, 0, 1, 1], [], []>} : vector<16x64xbf16>, vector<64x32xbf16>, vector<16x32xf32> -> vector<16x32xf32>
    %c0_17 = arith.constant 0 : index
    %c0_18 = arith.constant 0 : index
    %25 = vector.load %arg8[%c0_17, %c0_18] : memref<1x32xf32, #tpu.memory_space<vmem>>, vector<1x32xf32>
    %26 = vector.broadcast %25 : vector<1x32xf32> to vector<16x32xf32>
    %27 = arith.addf %24, %26 : vector<16x32xf32>
    %cst_19 = arith.constant 0.000000e+00 : f32
    %28 = vector.broadcast %cst_19 : f32 to vector<16x32xf32>
    %29 = arith.maximumf %27, %28 : vector<16x32xf32>
    %c0_20 = arith.constant 0 : index
    %c0_21 = arith.constant 0 : index
    %30 = vector.load %arg9[%c0_20, %c0_21] : memref<32x16xf32, #tpu.memory_space<vmem>>, vector<32x16xf32>
    %31 = arith.truncf %29 : vector<16x32xf32> to vector<16x32xbf16>
    %32 = arith.truncf %30 : vector<32x16xf32> to vector<32x16xbf16>
    %cst_22 = arith.constant dense<0.000000e+00> : vector<16x16xf32>
    %33 = tpu.matmul %31, %32, %cst_22 {dimension_numbers = #tpu.dot_dimension_numbers<[1], [0], [0], [1], [0, 0, 1, 1], [], []>} : vector<16x32xbf16>, vector<32x16xbf16>, vector<16x16xf32> -> vector<16x16xf32>
    %c0_23 = arith.constant 0 : index
    %c0_24 = arith.constant 0 : index
    %34 = vector.load %arg10[%c0_23, %c0_24] : memref<1x16xf32, #tpu.memory_space<vmem>>, vector<1x16xf32>
    %35 = vector.broadcast %34 : vector<1x16xf32> to vector<16x16xf32>
    %36 = arith.addf %33, %35 : vector<16x16xf32>
    %c0_25 = arith.constant 0 : index
    %c0_26 = arith.constant 0 : index
    %37 = vector.load %arg11[%c0_25, %c0_26] : memref<16x32xf32, #tpu.memory_space<vmem>>, vector<16x32xf32>
    %38 = arith.truncf %36 : vector<16x16xf32> to vector<16x16xbf16>
    %39 = arith.truncf %37 : vector<16x32xf32> to vector<16x32xbf16>
    %cst_27 = arith.constant dense<0.000000e+00> : vector<16x32xf32>
    %40 = tpu.matmul %38, %39, %cst_27 {dimension_numbers = #tpu.dot_dimension_numbers<[1], [0], [0], [1], [0, 0, 1, 1], [], []>} : vector<16x16xbf16>, vector<16x32xbf16>, vector<16x32xf32> -> vector<16x32xf32>
    %c0_28 = arith.constant 0 : index
    %c0_29 = arith.constant 0 : index
    %41 = vector.load %arg12[%c0_28, %c0_29] : memref<1x32xf32, #tpu.memory_space<vmem>>, vector<1x32xf32>
    %42 = vector.broadcast %41 : vector<1x32xf32> to vector<16x32xf32>
    %43 = arith.addf %40, %42 : vector<16x32xf32>
    %cst_30 = arith.constant 0.000000e+00 : f32
    %44 = vector.broadcast %cst_30 : f32 to vector<16x32xf32>
    %45 = arith.maximumf %43, %44 : vector<16x32xf32>
    %c0_31 = arith.constant 0 : index
    %c0_32 = arith.constant 0 : index
    %46 = vector.load %arg13[%c0_31, %c0_32] : memref<32x64xf32, #tpu.memory_space<vmem>>, vector<32x64xf32>
    %47 = arith.truncf %45 : vector<16x32xf32> to vector<16x32xbf16>
    %48 = arith.truncf %46 : vector<32x64xf32> to vector<32x64xbf16>
    %cst_33 = arith.constant dense<0.000000e+00> : vector<16x64xf32>
    %49 = tpu.matmul %47, %48, %cst_33 {dimension_numbers = #tpu.dot_dimension_numbers<[1], [0], [0], [1], [0, 0, 1, 1], [], []>} : vector<16x32xbf16>, vector<32x64xbf16>, vector<16x64xf32> -> vector<16x64xf32>
    %c0_34 = arith.constant 0 : index
    %c0_35 = arith.constant 0 : index
    %50 = vector.load %arg14[%c0_34, %c0_35] : memref<1x64xf32, #tpu.memory_space<vmem>>, vector<1x64xf32>
    %51 = vector.broadcast %50 : vector<1x64xf32> to vector<16x64xf32>
    %52 = arith.addf %49, %51 : vector<16x64xf32>
    %cst_36 = arith.constant 0.000000e+00 : f32
    %53 = vector.broadcast %cst_36 : f32 to vector<16x64xf32>
    %54 = arith.maximumf %52, %53 : vector<16x64xf32>
    %c0_37 = arith.constant 0 : index
    %c0_38 = arith.constant 0 : index
    %55 = vector.load %arg15[%c0_37, %c0_38] : memref<64x64xf32, #tpu.memory_space<vmem>>, vector<64x64xf32>
    %56 = arith.truncf %54 : vector<16x64xf32> to vector<16x64xbf16>
    %57 = arith.truncf %55 : vector<64x64xf32> to vector<64x64xbf16>
    %cst_39 = arith.constant dense<0.000000e+00> : vector<16x64xf32>
    %58 = tpu.matmul %56, %57, %cst_39 {dimension_numbers = #tpu.dot_dimension_numbers<[1], [0], [0], [1], [0, 0, 1, 1], [], []>} : vector<16x64xbf16>, vector<64x64xbf16>, vector<16x64xf32> -> vector<16x64xf32>
    %c0_40 = arith.constant 0 : index
    %c0_41 = arith.constant 0 : index
    %59 = vector.load %arg16[%c0_40, %c0_41] : memref<1x64xf32, #tpu.memory_space<vmem>>, vector<1x64xf32>
    %60 = vector.broadcast %59 : vector<1x64xf32> to vector<16x64xf32>
    %61 = arith.addf %58, %60 : vector<16x64xf32>
    %cst_42 = arith.constant 0.000000e+00 : f32
    %62 = vector.broadcast %cst_42 : f32 to vector<16x64xf32>
    %63 = arith.maximumf %61, %62 : vector<16x64xf32>
    %c0_43 = arith.constant 0 : index
    %c0_44 = arith.constant 0 : index
    %64 = vector.load %arg17[%c0_43, %c0_44] : memref<64x32xf32, #tpu.memory_space<vmem>>, vector<64x32xf32>
    %65 = arith.truncf %63 : vector<16x64xf32> to vector<16x64xbf16>
    %66 = arith.truncf %64 : vector<64x32xf32> to vector<64x32xbf16>
    %cst_45 = arith.constant dense<0.000000e+00> : vector<16x32xf32>
    %67 = tpu.matmul %65, %66, %cst_45 {dimension_numbers = #tpu.dot_dimension_numbers<[1], [0], [0], [1], [0, 0, 1, 1], [], []>} : vector<16x64xbf16>, vector<64x32xbf16>, vector<16x32xf32> -> vector<16x32xf32>
    %c0_46 = arith.constant 0 : index
    %c0_47 = arith.constant 0 : index
    %68 = vector.load %arg18[%c0_46, %c0_47] : memref<1x32xf32, #tpu.memory_space<vmem>>, vector<1x32xf32>
    %69 = vector.broadcast %68 : vector<1x32xf32> to vector<16x32xf32>
    %70 = arith.addf %67, %69 : vector<16x32xf32>
    %c0_48 = arith.constant 0 : index
    %c0_49 = arith.constant 0 : index
    %71 = vector.load %arg30[%c0_48, %c0_49] : memref<16x32xf32, #tpu.memory_space<vmem>>, vector<16x32xf32>
    tpu.vector_store %arg30[%c0_48, %c0_49], %70 {strides = array<i32>} : memref<16x32xf32, #tpu.memory_space<vmem>>, vector<16x32xf32>,
    %c0_50 = arith.constant 0 : index
    %c0_51 = arith.constant 0 : index
    %72 = vector.load %arg33[%c0_50, %c0_51] : memref<16x16xf32, #tpu.memory_space<vmem>>, vector<16x16xf32>
    tpu.vector_store %arg33[%c0_50, %c0_51], %36 {strides = array<i32>} : memref<16x16xf32, #tpu.memory_space<vmem>>, vector<16x16xf32>,
    %c0_52 = arith.constant 0 : index
    %c0_53 = arith.constant 0 : index
    %c0_54 = arith.constant 0 : index
    %73 = vector.load %arg19[%c0_52, %c0_53, %c0_54] : memref<4x32x64xf32, #tpu.memory_space<vmem>>, vector<1x32x64xf32>
    %74 = vector.shape_cast %73 : vector<1x32x64xf32> to vector<32x64xf32>
    %75 = arith.truncf %0 : vector<16x32xf32> to vector<16x32xbf16>
    %76 = arith.truncf %74 : vector<32x64xf32> to vector<32x64xbf16>
    %cst_55 = arith.constant dense<0.000000e+00> : vector<16x64xf32>
    %77 = tpu.matmul %75, %76, %cst_55 {dimension_numbers = #tpu.dot_dimension_numbers<[1], [0], [0], [1], [0, 0, 1, 1], [], []>} : vector<16x32xbf16>, vector<32x64xbf16>, vector<16x64xf32> -> vector<16x64xf32>
    %78 = arith.truncf %0 : vector<16x32xf32> to vector<16x32xbf16>
    %cst_56 = arith.constant dense<0.000000e+00> : vector<16x32xf32>
    %79 = tpu.matmul %2, %78, %cst_56 {dimension_numbers = #tpu.dot_dimension_numbers<[1], [0], [0], [1], [0, 0, 1, 1], [], []>} : vector<16x16xbf16>, vector<16x32xbf16>, vector<16x32xf32> -> vector<16x32xf32>
    %c1 = arith.constant 1 : index
    %c0_57 = arith.constant 0 : index
    %c0_58 = arith.constant 0 : index
    %80 = vector.load %arg19[%c1, %c0_57, %c0_58] : memref<4x32x64xf32, #tpu.memory_space<vmem>>, vector<1x32x64xf32>
    %81 = vector.shape_cast %80 : vector<1x32x64xf32> to vector<32x64xf32>
    %82 = arith.truncf %79 : vector<16x32xf32> to vector<16x32xbf16>
    %83 = arith.truncf %81 : vector<32x64xf32> to vector<32x64xbf16>
    %cst_59 = arith.constant dense<0.000000e+00> : vector<16x64xf32>
    %84 = tpu.matmul %82, %83, %cst_59 {dimension_numbers = #tpu.dot_dimension_numbers<[1], [0], [0], [1], [0, 0, 1, 1], [], []>} : vector<16x32xbf16>, vector<32x64xbf16>, vector<16x64xf32> -> vector<16x64xf32>
    %85 = arith.addf %77, %84 : vector<16x64xf32>
    %86 = arith.truncf %79 : vector<16x32xf32> to vector<16x32xbf16>
    %cst_60 = arith.constant dense<0.000000e+00> : vector<16x32xf32>
    %87 = tpu.matmul %2, %86, %cst_60 {dimension_numbers = #tpu.dot_dimension_numbers<[1], [0], [0], [1], [0, 0, 1, 1], [], []>} : vector<16x16xbf16>, vector<16x32xbf16>, vector<16x32xf32> -> vector<16x32xf32>
    %c2 = arith.constant 2 : index
    %c0_61 = arith.constant 0 : index
    %c0_62 = arith.constant 0 : index
    %88 = vector.load %arg19[%c2, %c0_61, %c0_62] : memref<4x32x64xf32, #tpu.memory_space<vmem>>, vector<1x32x64xf32>
    %89 = vector.shape_cast %88 : vector<1x32x64xf32> to vector<32x64xf32>
    %90 = arith.truncf %87 : vector<16x32xf32> to vector<16x32xbf16>
    %91 = arith.truncf %89 : vector<32x64xf32> to vector<32x64xbf16>
    %cst_63 = arith.constant dense<0.000000e+00> : vector<16x64xf32>
    %92 = tpu.matmul %90, %91, %cst_63 {dimension_numbers = #tpu.dot_dimension_numbers<[1], [0], [0], [1], [0, 0, 1, 1], [], []>} : vector<16x32xbf16>, vector<32x64xbf16>, vector<16x64xf32> -> vector<16x64xf32>
    %93 = arith.addf %85, %92 : vector<16x64xf32>
    %94 = arith.truncf %87 : vector<16x32xf32> to vector<16x32xbf16>
    %cst_64 = arith.constant dense<0.000000e+00> : vector<16x32xf32>
    %95 = tpu.matmul %2, %94, %cst_64 {dimension_numbers = #tpu.dot_dimension_numbers<[1], [0], [0], [1], [0, 0, 1, 1], [], []>} : vector<16x16xbf16>, vector<16x32xbf16>, vector<16x32xf32> -> vector<16x32xf32>
    %c3 = arith.constant 3 : index
    %c0_65 = arith.constant 0 : index
    %c0_66 = arith.constant 0 : index
    %96 = vector.load %arg19[%c3, %c0_65, %c0_66] : memref<4x32x64xf32, #tpu.memory_space<vmem>>, vector<1x32x64xf32>
    %97 = vector.shape_cast %96 : vector<1x32x64xf32> to vector<32x64xf32>
    %98 = arith.truncf %95 : vector<16x32xf32> to vector<16x32xbf16>
    %99 = arith.truncf %97 : vector<32x64xf32> to vector<32x64xbf16>
    %cst_67 = arith.constant dense<0.000000e+00> : vector<16x64xf32>
    %100 = tpu.matmul %98, %99, %cst_67 {dimension_numbers = #tpu.dot_dimension_numbers<[1], [0], [0], [1], [0, 0, 1, 1], [], []>} : vector<16x32xbf16>, vector<32x64xbf16>, vector<16x64xf32> -> vector<16x64xf32>
    %101 = arith.addf %93, %100 : vector<16x64xf32>
    %c0_68 = arith.constant 0 : index
    %c0_69 = arith.constant 0 : index
    %102 = vector.load %arg20[%c0_68, %c0_69] : memref<1x64xf32, #tpu.memory_space<vmem>>, vector<1x64xf32>
    %103 = vector.broadcast %102 : vector<1x64xf32> to vector<16x64xf32>
    %104 = arith.addf %101, %103 : vector<16x64xf32>
    %cst_70 = arith.constant 5.000000e-01 : f32
    %105 = vector.broadcast %cst_70 : f32 to vector<16x64xf32>
    %106 = arith.mulf %105, %104 : vector<16x64xf32>
    %cst_71 = arith.constant 5.000000e-01 : f32
    %107 = vector.broadcast %cst_71 : f32 to vector<16x64xf32>
    %108 = arith.mulf %107, %11 : vector<16x64xf32>
    %109 = arith.addf %106, %108 : vector<16x64xf32>
    %c0_72 = arith.constant 0 : index
    %c0_73 = arith.constant 0 : index
    %c0_74 = arith.constant 0 : index
    %110 = vector.load %arg21[%c0_72, %c0_73, %c0_74] : memref<4x64x64xf32, #tpu.memory_space<vmem>>, vector<1x64x64xf32>
    %111 = vector.shape_cast %110 : vector<1x64x64xf32> to vector<64x64xf32>
    %112 = arith.truncf %109 : vector<16x64xf32> to vector<16x64xbf16>
    %113 = arith.truncf %111 : vector<64x64xf32> to vector<64x64xbf16>
    %cst_75 = arith.constant dense<0.000000e+00> : vector<16x64xf32>
    %114 = tpu.matmul %112, %113, %cst_75 {dimension_numbers = #tpu.dot_dimension_numbers<[1], [0], [0], [1], [0, 0, 1, 1], [], []>} : vector<16x64xbf16>, vector<64x64xbf16>, vector<16x64xf32> -> vector<16x64xf32>
    %115 = arith.truncf %109 : vector<16x64xf32> to vector<16x64xbf16>
    %cst_76 = arith.constant dense<0.000000e+00> : vector<16x64xf32>
    %116 = tpu.matmul %2, %115, %cst_76 {dimension_numbers = #tpu.dot_dimension_numbers<[1], [0], [0], [1], [0, 0, 1, 1], [], []>} : vector<16x16xbf16>, vector<16x64xbf16>, vector<16x64xf32> -> vector<16x64xf32>
    %c1_77 = arith.constant 1 : index
    %c0_78 = arith.constant 0 : index
    %c0_79 = arith.constant 0 : index
    %117 = vector.load %arg21[%c1_77, %c0_78, %c0_79] : memref<4x64x64xf32, #tpu.memory_space<vmem>>, vector<1x64x64xf32>
    %118 = vector.shape_cast %117 : vector<1x64x64xf32> to vector<64x64xf32>
    %119 = arith.truncf %116 : vector<16x64xf32> to vector<16x64xbf16>
    %120 = arith.truncf %118 : vector<64x64xf32> to vector<64x64xbf16>
    %cst_80 = arith.constant dense<0.000000e+00> : vector<16x64xf32>
    %121 = tpu.matmul %119, %120, %cst_80 {dimension_numbers = #tpu.dot_dimension_numbers<[1], [0], [0], [1], [0, 0, 1, 1], [], []>} : vector<16x64xbf16>, vector<64x64xbf16>, vector<16x64xf32> -> vector<16x64xf32>
    %122 = arith.addf %114, %121 : vector<16x64xf32>
    %123 = arith.truncf %116 : vector<16x64xf32> to vector<16x64xbf16>
    %cst_81 = arith.constant dense<0.000000e+00> : vector<16x64xf32>
    %124 = tpu.matmul %2, %123, %cst_81 {dimension_numbers = #tpu.dot_dimension_numbers<[1], [0], [0], [1], [0, 0, 1, 1], [], []>} : vector<16x16xbf16>, vector<16x64xbf16>, vector<16x64xf32> -> vector<16x64xf32>
    %c2_82 = arith.constant 2 : index
    %c0_83 = arith.constant 0 : index
    %c0_84 = arith.constant 0 : index
    %125 = vector.load %arg21[%c2_82, %c0_83, %c0_84] : memref<4x64x64xf32, #tpu.memory_space<vmem>>, vector<1x64x64xf32>
    %126 = vector.shape_cast %125 : vector<1x64x64xf32> to vector<64x64xf32>
    %127 = arith.truncf %124 : vector<16x64xf32> to vector<16x64xbf16>
    %128 = arith.truncf %126 : vector<64x64xf32> to vector<64x64xbf16>
    %cst_85 = arith.constant dense<0.000000e+00> : vector<16x64xf32>
    %129 = tpu.matmul %127, %128, %cst_85 {dimension_numbers = #tpu.dot_dimension_numbers<[1], [0], [0], [1], [0, 0, 1, 1], [], []>} : vector<16x64xbf16>, vector<64x64xbf16>, vector<16x64xf32> -> vector<16x64xf32>
    %130 = arith.addf %122, %129 : vector<16x64xf32>
    %131 = arith.truncf %124 : vector<16x64xf32> to vector<16x64xbf16>
    %cst_86 = arith.constant dense<0.000000e+00> : vector<16x64xf32>
    %132 = tpu.matmul %2, %131, %cst_86 {dimension_numbers = #tpu.dot_dimension_numbers<[1], [0], [0], [1], [0, 0, 1, 1], [], []>} : vector<16x16xbf16>, vector<16x64xbf16>, vector<16x64xf32> -> vector<16x64xf32>
    %c3_87 = arith.constant 3 : index
    %c0_88 = arith.constant 0 : index
    %c0_89 = arith.constant 0 : index
    %133 = vector.load %arg21[%c3_87, %c0_88, %c0_89] : memref<4x64x64xf32, #tpu.memory_space<vmem>>, vector<1x64x64xf32>
    %134 = vector.shape_cast %133 : vector<1x64x64xf32> to vector<64x64xf32>
    %135 = arith.truncf %132 : vector<16x64xf32> to vector<16x64xbf16>
    %136 = arith.truncf %134 : vector<64x64xf32> to vector<64x64xbf16>
    %cst_90 = arith.constant dense<0.000000e+00> : vector<16x64xf32>
    %137 = tpu.matmul %135, %136, %cst_90 {dimension_numbers = #tpu.dot_dimension_numbers<[1], [0], [0], [1], [0, 0, 1, 1], [], []>} : vector<16x64xbf16>, vector<64x64xbf16>, vector<16x64xf32> -> vector<16x64xf32>
    %138 = arith.addf %130, %137 : vector<16x64xf32>
    %c0_91 = arith.constant 0 : index
    %c0_92 = arith.constant 0 : index
    %139 = vector.load %arg22[%c0_91, %c0_92] : memref<1x64xf32, #tpu.memory_space<vmem>>, vector<1x64xf32>
    %140 = vector.broadcast %139 : vector<1x64xf32> to vector<16x64xf32>
    %141 = arith.addf %138, %140 : vector<16x64xf32>
    %cst_93 = arith.constant 5.000000e-01 : f32
    %142 = vector.broadcast %cst_93 : f32 to vector<16x64xf32>
    %143 = arith.mulf %142, %141 : vector<16x64xf32>
    %cst_94 = arith.constant 5.000000e-01 : f32
    %144 = vector.broadcast %cst_94 : f32 to vector<16x64xf32>
    %145 = arith.mulf %144, %20 : vector<16x64xf32>
    %146 = arith.addf %143, %145 : vector<16x64xf32>
    %c0_95 = arith.constant 0 : index
    %c0_96 = arith.constant 0 : index
    %c0_97 = arith.constant 0 : index
    %147 = vector.load %arg23[%c0_95, %c0_96, %c0_97] : memref<4x64x32xf32, #tpu.memory_space<vmem>>, vector<1x64x32xf32>
    %148 = vector.shape_cast %147 : vector<1x64x32xf32> to vector<64x32xf32>
    %149 = arith.truncf %146 : vector<16x64xf32> to vector<16x64xbf16>
    %150 = arith.truncf %148 : vector<64x32xf32> to vector<64x32xbf16>
    %cst_98 = arith.constant dense<0.000000e+00> : vector<16x32xf32>
    %151 = tpu.matmul %149, %150, %cst_98 {dimension_numbers = #tpu.dot_dimension_numbers<[1], [0], [0], [1], [0, 0, 1, 1], [], []>} : vector<16x64xbf16>, vector<64x32xbf16>, vector<16x32xf32> -> vector<16x32xf32>
    %c1_99 = arith.constant 1 : index
    %c0_100 = arith.constant 0 : index
    %c0_101 = arith.constant 0 : index
    %152 = vector.load %arg23[%c1_99, %c0_100, %c0_101] : memref<4x64x32xf32, #tpu.memory_space<vmem>>, vector<1x64x32xf32>
    %153 = vector.shape_cast %152 : vector<1x64x32xf32> to vector<64x32xf32>
    %154 = arith.truncf %146 : vector<16x64xf32> to vector<16x64xbf16>
    %155 = arith.truncf %153 : vector<64x32xf32> to vector<64x32xbf16>
    %cst_102 = arith.constant dense<0.000000e+00> : vector<16x32xf32>
    %156 = tpu.matmul %154, %155, %cst_102 {dimension_numbers = #tpu.dot_dimension_numbers<[1], [0], [0], [1], [0, 0, 1, 1], [], []>} : vector<16x64xbf16>, vector<64x32xbf16>, vector<16x32xf32> -> vector<16x32xf32>
    %c2_103 = arith.constant 2 : index
    %c0_104 = arith.constant 0 : index
    %c0_105 = arith.constant 0 : index
    %157 = vector.load %arg23[%c2_103, %c0_104, %c0_105] : memref<4x64x32xf32, #tpu.memory_space<vmem>>, vector<1x64x32xf32>
    %158 = vector.shape_cast %157 : vector<1x64x32xf32> to vector<64x32xf32>
    %159 = arith.truncf %146 : vector<16x64xf32> to vector<16x64xbf16>
    %160 = arith.truncf %158 : vector<64x32xf32> to vector<64x32xbf16>
    %cst_106 = arith.constant dense<0.000000e+00> : vector<16x32xf32>
    %161 = tpu.matmul %159, %160, %cst_106 {dimension_numbers = #tpu.dot_dimension_numbers<[1], [0], [0], [1], [0, 0, 1, 1], [], []>} : vector<16x64xbf16>, vector<64x32xbf16>, vector<16x32xf32> -> vector<16x32xf32>
    %c3_107 = arith.constant 3 : index
    %c0_108 = arith.constant 0 : index
    %c0_109 = arith.constant 0 : index
    %162 = vector.load %arg23[%c3_107, %c0_108, %c0_109] : memref<4x64x32xf32, #tpu.memory_space<vmem>>, vector<1x64x32xf32>
    %163 = vector.shape_cast %162 : vector<1x64x32xf32> to vector<64x32xf32>
    %164 = arith.truncf %146 : vector<16x64xf32> to vector<16x64xbf16>
    %165 = arith.truncf %163 : vector<64x32xf32> to vector<64x32xbf16>
    %cst_110 = arith.constant dense<0.000000e+00> : vector<16x32xf32>
    %166 = tpu.matmul %164, %165, %cst_110 {dimension_numbers = #tpu.dot_dimension_numbers<[1], [0], [0], [1], [0, 0, 1, 1], [], []>} : vector<16x64xbf16>, vector<64x32xbf16>, vector<16x32xf32> -> vector<16x32xf32>
    %167 = arith.truncf %166 : vector<16x32xf32> to vector<16x32xbf16>
    %cst_111 = arith.constant dense<0.000000e+00> : vector<16x32xf32>
    %168 = tpu.matmul %2, %167, %cst_111 {dimension_numbers = #tpu.dot_dimension_numbers<[1], [0], [0], [1], [0, 0, 1, 1], [], []>} : vector<16x16xbf16>, vector<16x32xbf16>, vector<16x32xf32> -> vector<16x32xf32>
    %169 = arith.addf %161, %168 : vector<16x32xf32>
    %170 = arith.truncf %169 : vector<16x32xf32> to vector<16x32xbf16>
    %cst_112 = arith.constant dense<0.000000e+00> : vector<16x32xf32>
    %171 = tpu.matmul %2, %170, %cst_112 {dimension_numbers = #tpu.dot_dimension_numbers<[1], [0], [0], [1], [0, 0, 1, 1], [], []>} : vector<16x16xbf16>, vector<16x32xbf16>, vector<16x32xf32> -> vector<16x32xf32>
    %172 = arith.addf %156, %171 : vector<16x32xf32>
    %173 = arith.truncf %172 : vector<16x32xf32> to vector<16x32xbf16>
    %cst_113 = arith.constant dense<0.000000e+00> : vector<16x32xf32>
    %174 = tpu.matmul %2, %173, %cst_113 {dimension_numbers = #tpu.dot_dimension_numbers<[1], [0], [0], [1], [0, 0, 1, 1], [], []>} : vector<16x16xbf16>, vector<16x32xbf16>, vector<16x32xf32> -> vector<16x32xf32>
    %175 = arith.addf %151, %174 : vector<16x32xf32>
    %c0_114 = arith.constant 0 : index
    %c0_115 = arith.constant 0 : index
    %176 = vector.load %arg24[%c0_114, %c0_115] : memref<1x32xf32, #tpu.memory_space<vmem>>, vector<1x32xf32>
    %177 = vector.broadcast %176 : vector<1x32xf32> to vector<16x32xf32>
    %178 = arith.addf %175, %177 : vector<16x32xf32>
    %cst_116 = arith.constant 5.000000e-01 : f32
    %179 = vector.broadcast %cst_116 : f32 to vector<16x32xf32>
    %180 = arith.mulf %179, %178 : vector<16x32xf32>
    %cst_117 = arith.constant 5.000000e-01 : f32
    %181 = vector.broadcast %cst_117 : f32 to vector<16x32xf32>
    %182 = arith.mulf %181, %29 : vector<16x32xf32>
    %183 = arith.addf %180, %182 : vector<16x32xf32>
    %c0_118 = arith.constant 0 : index
    %c0_119 = arith.constant 0 : index
    %c0_120 = arith.constant 0 : index
    %184 = vector.load %arg25[%c0_118, %c0_119, %c0_120] : memref<4x32x16xf32, #tpu.memory_space<vmem>>, vector<1x32x16xf32>
    %185 = vector.shape_cast %184 : vector<1x32x16xf32> to vector<32x16xf32>
    %186 = arith.truncf %183 : vector<16x32xf32> to vector<16x32xbf16>
    %187 = arith.truncf %185 : vector<32x16xf32> to vector<32x16xbf16>
    %cst_121 = arith.constant dense<0.000000e+00> : vector<16x16xf32>
    %188 = tpu.matmul %186, %187, %cst_121 {dimension_numbers = #tpu.dot_dimension_numbers<[1], [0], [0], [1], [0, 0, 1, 1], [], []>} : vector<16x32xbf16>, vector<32x16xbf16>, vector<16x16xf32> -> vector<16x16xf32>
    %c1_122 = arith.constant 1 : index
    %c0_123 = arith.constant 0 : index
    %c0_124 = arith.constant 0 : index
    %189 = vector.load %arg25[%c1_122, %c0_123, %c0_124] : memref<4x32x16xf32, #tpu.memory_space<vmem>>, vector<1x32x16xf32>
    %190 = vector.shape_cast %189 : vector<1x32x16xf32> to vector<32x16xf32>
    %191 = arith.truncf %183 : vector<16x32xf32> to vector<16x32xbf16>
    %192 = arith.truncf %190 : vector<32x16xf32> to vector<32x16xbf16>
    %cst_125 = arith.constant dense<0.000000e+00> : vector<16x16xf32>
    %193 = tpu.matmul %191, %192, %cst_125 {dimension_numbers = #tpu.dot_dimension_numbers<[1], [0], [0], [1], [0, 0, 1, 1], [], []>} : vector<16x32xbf16>, vector<32x16xbf16>, vector<16x16xf32> -> vector<16x16xf32>
    %c2_126 = arith.constant 2 : index
    %c0_127 = arith.constant 0 : index
    %c0_128 = arith.constant 0 : index
    %194 = vector.load %arg25[%c2_126, %c0_127, %c0_128] : memref<4x32x16xf32, #tpu.memory_space<vmem>>, vector<1x32x16xf32>
    %195 = vector.shape_cast %194 : vector<1x32x16xf32> to vector<32x16xf32>
    %196 = arith.truncf %183 : vector<16x32xf32> to vector<16x32xbf16>
    %197 = arith.truncf %195 : vector<32x16xf32> to vector<32x16xbf16>
    %cst_129 = arith.constant dense<0.000000e+00> : vector<16x16xf32>
    %198 = tpu.matmul %196, %197, %cst_129 {dimension_numbers = #tpu.dot_dimension_numbers<[1], [0], [0], [1], [0, 0, 1, 1], [], []>} : vector<16x32xbf16>, vector<32x16xbf16>, vector<16x16xf32> -> vector<16x16xf32>
    %c3_130 = arith.constant 3 : index
    %c0_131 = arith.constant 0 : index
    %c0_132 = arith.constant 0 : index
    %199 = vector.load %arg25[%c3_130, %c0_131, %c0_132] : memref<4x32x16xf32, #tpu.memory_space<vmem>>, vector<1x32x16xf32>
    %200 = vector.shape_cast %199 : vector<1x32x16xf32> to vector<32x16xf32>
    %201 = arith.truncf %183 : vector<16x32xf32> to vector<16x32xbf16>
    %202 = arith.truncf %200 : vector<32x16xf32> to vector<32x16xbf16>
    %cst_133 = arith.constant dense<0.000000e+00> : vector<16x16xf32>
    %203 = tpu.matmul %201, %202, %cst_133 {dimension_numbers = #tpu.dot_dimension_numbers<[1], [0], [0], [1], [0, 0, 1, 1], [], []>} : vector<16x32xbf16>, vector<32x16xbf16>, vector<16x16xf32> -> vector<16x16xf32>
    %204 = arith.truncf %203 : vector<16x16xf32> to vector<16x16xbf16>
    %cst_134 = arith.constant dense<0.000000e+00> : vector<16x16xf32>
    %205 = tpu.matmul %2, %204, %cst_134 {dimension_numbers = #tpu.dot_dimension_numbers<[1], [0], [0], [1], [0, 0, 1, 1], [], []>} : vector<16x16xbf16>, vector<16x16xbf16>, vector<16x16xf32> -> vector<16x16xf32>
    %206 = arith.addf %198, %205 : vector<16x16xf32>
    %207 = arith.truncf %206 : vector<16x16xf32> to vector<16x16xbf16>
    %cst_135 = arith.constant dense<0.000000e+00> : vector<16x16xf32>
    %208 = tpu.matmul %2, %207, %cst_135 {dimension_numbers = #tpu.dot_dimension_numbers<[1], [0], [0], [1], [0, 0, 1, 1], [], []>} : vector<16x16xbf16>, vector<16x16xbf16>, vector<16x16xf32> -> vector<16x16xf32>
    %209 = arith.addf %193, %208 : vector<16x16xf32>
    %210 = arith.truncf %209 : vector<16x16xf32> to vector<16x16xbf16>
    %cst_136 = arith.constant dense<0.000000e+00> : vector<16x16xf32>
    %211 = tpu.matmul %2, %210, %cst_136 {dimension_numbers = #tpu.dot_dimension_numbers<[1], [0], [0], [1], [0, 0, 1, 1], [], []>} : vector<16x16xbf16>, vector<16x16xbf16>, vector<16x16xf32> -> vector<16x16xf32>
    %212 = arith.addf %188, %211 : vector<16x16xf32>
    %c0_137 = arith.constant 0 : index
    %c0_138 = arith.constant 0 : index
    %213 = vector.load %arg26[%c0_137, %c0_138] : memref<1x16xf32, #tpu.memory_space<vmem>>, vector<1x16xf32>
    %214 = vector.broadcast %213 : vector<1x16xf32> to vector<16x16xf32>
    %215 = arith.addf %212, %214 : vector<16x16xf32>
    %cst_139 = arith.constant 5.000000e-01 : f32
    %216 = vector.broadcast %cst_139 : f32 to vector<16x16xf32>
    %217 = arith.mulf %216, %215 : vector<16x16xf32>
    %cst_140 = arith.constant 5.000000e-01 : f32
    %218 = vector.broadcast %cst_140 : f32 to vector<16x16xf32>
    %219 = arith.mulf %218, %36 : vector<16x16xf32>
    %220 = arith.addf %217, %219 : vector<16x16xf32>
    %c0_141 = arith.constant 0 : index
    %c0_142 = arith.constant 0 : index
    %c0_143 = arith.constant 0 : index
    %221 = vector.load %arg27[%c0_141, %c0_142, %c0_143] : memref<4x16x4xf32, #tpu.memory_space<vmem>>, vector<1x16x4xf32>
    %222 = vector.shape_cast %221 : vector<1x16x4xf32> to vector<16x4xf32>
    %223 = arith.truncf %220 : vector<16x16xf32> to vector<16x16xbf16>
    %224 = arith.truncf %222 : vector<16x4xf32> to vector<16x4xbf16>
    %cst_144 = arith.constant dense<0.000000e+00> : vector<16x4xf32>
    %225 = tpu.matmul %223, %224, %cst_144 {dimension_numbers = #tpu.dot_dimension_numbers<[1], [0], [0], [1], [0, 0, 1, 1], [], []>} : vector<16x16xbf16>, vector<16x4xbf16>, vector<16x4xf32> -> vector<16x4xf32>
    %c1_145 = arith.constant 1 : index
    %c0_146 = arith.constant 0 : index
    %c0_147 = arith.constant 0 : index
    %226 = vector.load %arg27[%c1_145, %c0_146, %c0_147] : memref<4x16x4xf32, #tpu.memory_space<vmem>>, vector<1x16x4xf32>
    %227 = vector.shape_cast %226 : vector<1x16x4xf32> to vector<16x4xf32>
    %228 = arith.truncf %220 : vector<16x16xf32> to vector<16x16xbf16>
    %229 = arith.truncf %227 : vector<16x4xf32> to vector<16x4xbf16>
    %cst_148 = arith.constant dense<0.000000e+00> : vector<16x4xf32>
    %230 = tpu.matmul %228, %229, %cst_148 {dimension_numbers = #tpu.dot_dimension_numbers<[1], [0], [0], [1], [0, 0, 1, 1], [], []>} : vector<16x16xbf16>, vector<16x4xbf16>, vector<16x4xf32> -> vector<16x4xf32>
    %c2_149 = arith.constant 2 : index
    %c0_150 = arith.constant 0 : index
    %c0_151 = arith.constant 0 : index
    %231 = vector.load %arg27[%c2_149, %c0_150, %c0_151] : memref<4x16x4xf32, #tpu.memory_space<vmem>>, vector<1x16x4xf32>
    %232 = vector.shape_cast %231 : vector<1x16x4xf32> to vector<16x4xf32>
    %233 = arith.truncf %220 : vector<16x16xf32> to vector<16x16xbf16>
    %234 = arith.truncf %232 : vector<16x4xf32> to vector<16x4xbf16>
    %cst_152 = arith.constant dense<0.000000e+00> : vector<16x4xf32>
    %235 = tpu.matmul %233, %234, %cst_152 {dimension_numbers = #tpu.dot_dimension_numbers<[1], [0], [0], [1], [0, 0, 1, 1], [], []>} : vector<16x16xbf16>, vector<16x4xbf16>, vector<16x4xf32> -> vector<16x4xf32>
    %c3_153 = arith.constant 3 : index
    %c0_154 = arith.constant 0 : index
    %c0_155 = arith.constant 0 : index
    %236 = vector.load %arg27[%c3_153, %c0_154, %c0_155] : memref<4x16x4xf32, #tpu.memory_space<vmem>>, vector<1x16x4xf32>
    %237 = vector.shape_cast %236 : vector<1x16x4xf32> to vector<16x4xf32>
    %238 = arith.truncf %220 : vector<16x16xf32> to vector<16x16xbf16>
    %239 = arith.truncf %237 : vector<16x4xf32> to vector<16x4xbf16>
    %cst_156 = arith.constant dense<0.000000e+00> : vector<16x4xf32>
    %240 = tpu.matmul %238, %239, %cst_156 {dimension_numbers = #tpu.dot_dimension_numbers<[1], [0], [0], [1], [0, 0, 1, 1], [], []>} : vector<16x16xbf16>, vector<16x4xbf16>, vector<16x4xf32> -> vector<16x4xf32>
    %241 = arith.truncf %240 : vector<16x4xf32> to vector<16x4xbf16>
    %cst_157 = arith.constant dense<0.000000e+00> : vector<16x4xf32>
    %242 = tpu.matmul %2, %241, %cst_157 {dimension_numbers = #tpu.dot_dimension_numbers<[1], [0], [0], [1], [0, 0, 1, 1], [], []>} : vector<16x16xbf16>, vector<16x4xbf16>, vector<16x4xf32> -> vector<16x4xf32>
    %243 = arith.addf %235, %242 : vector<16x4xf32>
    %244 = arith.truncf %243 : vector<16x4xf32> to vector<16x4xbf16>
    %cst_158 = arith.constant dense<0.000000e+00> : vector<16x4xf32>
    %245 = tpu.matmul %2, %244, %cst_158 {dimension_numbers = #tpu.dot_dimension_numbers<[1], [0], [0], [1], [0, 0, 1, 1], [], []>} : vector<16x16xbf16>, vector<16x4xbf16>, vector<16x4xf32> -> vector<16x4xf32>
    %246 = arith.addf %230, %245 : vector<16x4xf32>
    %247 = arith.truncf %246 : vector<16x4xf32> to vector<16x4xbf16>
    %cst_159 = arith.constant dense<0.000000e+00> : vector<16x4xf32>
    %248 = tpu.matmul %2, %247, %cst_159 {dimension_numbers = #tpu.dot_dimension_numbers<[1], [0], [0], [1], [0, 0, 1, 1], [], []>} : vector<16x16xbf16>, vector<16x4xbf16>, vector<16x4xf32> -> vector<16x4xf32>
    %249 = arith.addf %225, %248 : vector<16x4xf32>
    %c0_160 = arith.constant 0 : index
    %c0_161 = arith.constant 0 : index
    %250 = vector.load %arg28[%c0_160, %c0_161] : memref<1x4xf32, #tpu.memory_space<vmem>>, vector<1x4xf32>
    %251 = vector.broadcast %250 : vector<1x4xf32> to vector<16x4xf32>
    %252 = arith.addf %249, %251 : vector<16x4xf32>
    %cst_162 = arith.constant dense<0xFF800000> : vector<16xf32>
    %253 = vector.multi_reduction <maximumf>, %252, %cst_162 [1] : vector<16x4xf32> to vector<16xf32>
    %254 = vector.shape_cast %253 : vector<16xf32> to vector<16x1xf32>
    %255 = vector.broadcast %254 : vector<16x1xf32> to vector<16x4xf32>
    %256 = arith.subf %252, %255 : vector<16x4xf32>
    %257 = math.exp %256 : vector<16x4xf32>
    %cst_163 = arith.constant dense<0.000000e+00> : vector<16xf32>
    %258 = vector.multi_reduction <add>, %257, %cst_163 [1] : vector<16x4xf32> to vector<16xf32>
    %259 = vector.shape_cast %258 : vector<16xf32> to vector<16x1xf32>
    %260 = tpu.reciprocal %259 {approx = true} : vector<16x1xf32> -> vector<16x1xf32>
    %261 = vector.broadcast %260 : vector<16x1xf32> to vector<16x4xf32>
    %262 = arith.mulf %257, %261 : vector<16x4xf32>
    %c0_164 = arith.constant 0 : index
    %c0_165 = arith.constant 0 : index
    %263 = vector.load %arg32[%c0_164, %c0_165] : memref<16x4xf32, #tpu.memory_space<vmem>>, vector<16x4xf32>
    tpu.vector_store %arg32[%c0_164, %c0_165], %262 {strides = array<i32>} : memref<16x4xf32, #tpu.memory_space<vmem>>, vector<16x4xf32>,
    %c0_166 = arith.constant 0 : index
    %c0_167 = arith.constant 0 : index
    %264 = vector.load %arg29[%c0_166, %c0_167] : memref<4x16xf32, #tpu.memory_space<vmem>>, vector<4x16xf32>
    %265 = arith.truncf %36 : vector<16x16xf32> to vector<16x16xbf16>
    %266 = arith.truncf %264 : vector<4x16xf32> to vector<4x16xbf16>
    "tpu.trace_start"() <{level = 10 : i32, message = "nd,kd->nk"}> : () -> ()
    %cst_168 = arith.constant dense<0.000000e+00> : vector<16x4xf32>
    %267 = tpu.matmul %265, %266, %cst_168 {dimension_numbers = #tpu.dot_dimension_numbers<[1], [1], [0], [0], [0, 0, 1, 0], [], []>} : vector<16x16xbf16>, vector<4x16xbf16>, vector<16x4xf32> -> vector<16x4xf32>
    "tpu.trace_stop"() : () -> ()
    %268 = arith.mulf %36, %36 : vector<16x16xf32>
    %cst_169 = arith.constant dense<0.000000e+00> : vector<16xf32>
    %269 = vector.multi_reduction <add>, %268, %cst_169 [1] : vector<16x16xf32> to vector<16xf32>
    %270 = vector.shape_cast %269 : vector<16xf32> to vector<16x1xf32>
    %cst_170 = arith.constant 1.000000e+00 : f32
    %271 = vector.broadcast %cst_170 : f32 to vector<1x16xf32>
    %272 = arith.mulf %264, %264 : vector<4x16xf32>
    "tpu.trace_start"() <{level = 10 : i32, message = "od,kd->ok"}> : () -> ()
    %cst_171 = arith.constant dense<0.000000e+00> : vector<1x4xf32>
    %273 = tpu.matmul %271, %272, %cst_171 {dimension_numbers = #tpu.dot_dimension_numbers<[1], [1], [0], [0], [0, 0, 1, 0], [], []>} : vector<1x16xf32>, vector<4x16xf32>, vector<1x4xf32> -> vector<1x4xf32>
    "tpu.trace_stop"() : () -> ()
    %274 = vector.broadcast %270 : vector<16x1xf32> to vector<16x4xf32>
    %275 = vector.broadcast %273 : vector<1x4xf32> to vector<16x4xf32>
    %276 = arith.addf %274, %275 : vector<16x4xf32>
    %cst_172 = arith.constant 2.000000e+00 : f32
    %277 = vector.broadcast %cst_172 : f32 to vector<16x4xf32>
    %278 = arith.mulf %277, %267 : vector<16x4xf32>
    %279 = arith.subf %276, %278 : vector<16x4xf32>
    %cst_173 = arith.constant 0.000000e+00 : f32
    %280 = vector.broadcast %cst_173 : f32 to vector<16x4xf32>
    %281 = arith.maximumf %279, %280 : vector<16x4xf32>
    %cst_174 = arith.constant 1.000000e+00 : f32
    %282 = vector.broadcast %cst_174 : f32 to vector<16x4xf32>
    %283 = arith.mulf %281, %282 : vector<16x4xf32>
    %cst_175 = arith.constant 1.000000e+00 : f32
    %284 = vector.broadcast %cst_175 : f32 to vector<16x4xf32>
    %285 = arith.addf %284, %283 : vector<16x4xf32>
    %cst_176 = arith.constant 1.000000e+00 : f32
    %286 = vector.broadcast %cst_176 : f32 to vector<16x4xf32>
    %287 = arith.divf %286, %285 : vector<16x4xf32>
    %cst_177 = arith.constant dense<0.000000e+00> : vector<16xf32>
    %288 = vector.multi_reduction <add>, %287, %cst_177 [1] : vector<16x4xf32> to vector<16xf32>
    %289 = vector.shape_cast %288 : vector<16xf32> to vector<16x1xf32>
    %290 = tpu.reciprocal %289 {approx = true} : vector<16x1xf32> -> vector<16x1xf32>
    %291 = vector.broadcast %290 : vector<16x1xf32> to vector<16x4xf32>
    %292 = arith.mulf %287, %291 : vector<16x4xf32>
    %c0_178 = arith.constant 0 : index
    %c0_179 = arith.constant 0 : index
    %293 = vector.load %arg31[%c0_178, %c0_179] : memref<16x4xf32, #tpu.memory_space<vmem>>, vector<16x4xf32>
    tpu.vector_store %arg31[%c0_178, %c0_179], %292 {strides = array<i32>} : memref<16x4xf32, #tpu.memory_space<vmem>>, vector<16x4xf32>,
    return
  }
  func.func @transform_0(%arg0: i32) -> (i32, i32) {
    %c0_i32 = arith.constant 0 : i32
    %c0_i32_0 = arith.constant 0 : i32
    %c0_i32_1 = arith.constant 0 : i32
    return %c0_i32, %c0_i32_0 : i32, i32
  }
  func.func @transform_1(%arg0: i32) -> (i32, i32) {
    %c0_i32 = arith.constant 0 : i32
    %c0_i32_0 = arith.constant 0 : i32
    %c0_i32_1 = arith.constant 0 : i32
    return %c0_i32, %c0_i32_0 : i32, i32
  }
  func.func @transform_2(%arg0: i32) -> (i32, i32) {
    %c0_i32 = arith.constant 0 : i32
    %c0_i32_0 = arith.constant 0 : i32
    %c0_i32_1 = arith.constant 0 : i32
    return %c0_i32, %c0_i32_0 : i32, i32
  }
  func.func @transform_3(%arg0: i32) -> (i32, i32) {
    %c0_i32 = arith.constant 0 : i32
    %c0_i32_0 = arith.constant 0 : i32
    %c0_i32_1 = arith.constant 0 : i32
    return %c0_i32, %c0_i32_0 : i32, i32
  }
  func.func @transform_4(%arg0: i32) -> (i32, i32) {
    %c0_i32 = arith.constant 0 : i32
    %c0_i32_0 = arith.constant 0 : i32
    %c0_i32_1 = arith.constant 0 : i32
    return %c0_i32, %c0_i32_0 : i32, i32
  }
  func.func @transform_5(%arg0: i32) -> (i32, i32) {
    %c0_i32 = arith.constant 0 : i32
    %c0_i32_0 = arith.constant 0 : i32
    %c0_i32_1 = arith.constant 0 : i32
    return %c0_i32, %c0_i32_0 : i32, i32
  }
  func.func @transform_6(%arg0: i32) -> (i32, i32) {
    %c0_i32 = arith.constant 0 : i32
    %c0_i32_0 = arith.constant 0 : i32
    %c0_i32_1 = arith.constant 0 : i32
    return %c0_i32, %c0_i32_0 : i32, i32
  }
  func.func @transform_7(%arg0: i32) -> (i32, i32) {
    %c0_i32 = arith.constant 0 : i32
    %c0_i32_0 = arith.constant 0 : i32
    %c0_i32_1 = arith.constant 0 : i32
    return %c0_i32, %c0_i32_0 : i32, i32
  }
  func.func @transform_8(%arg0: i32) -> (i32, i32) {
    %c0_i32 = arith.constant 0 : i32
    %c0_i32_0 = arith.constant 0 : i32
    %c0_i32_1 = arith.constant 0 : i32
    return %c0_i32, %c0_i32_0 : i32, i32
  }
  func.func @transform_9(%arg0: i32) -> (i32, i32) {
    %c0_i32 = arith.constant 0 : i32
    %c0_i32_0 = arith.constant 0 : i32
    %c0_i32_1 = arith.constant 0 : i32
    return %c0_i32, %c0_i32_0 : i32, i32
  }
  func.func @transform_10(%arg0: i32) -> (i32, i32) {
    %c0_i32 = arith.constant 0 : i32
    %c0_i32_0 = arith.constant 0 : i32
    %c0_i32_1 = arith.constant 0 : i32
    return %c0_i32, %c0_i32_0 : i32, i32
  }
  func.func @transform_11(%arg0: i32) -> (i32, i32) {
    %c0_i32 = arith.constant 0 : i32
    %c0_i32_0 = arith.constant 0 : i32
    %c0_i32_1 = arith.constant 0 : i32
    return %c0_i32, %c0_i32_0 : i32, i32
  }
  func.func @transform_12(%arg0: i32) -> (i32, i32) {
    %c0_i32 = arith.constant 0 : i32
    %c0_i32_0 = arith.constant 0 : i32
    %c0_i32_1 = arith.constant 0 : i32
    return %c0_i32, %c0_i32_0 : i32, i32
  }
  func.func @transform_13(%arg0: i32) -> (i32, i32) {
    %c0_i32 = arith.constant 0 : i32
    %c0_i32_0 = arith.constant 0 : i32
    %c0_i32_1 = arith.constant 0 : i32
    return %c0_i32, %c0_i32_0 : i32, i32
  }
  func.func @transform_14(%arg0: i32) -> (i32, i32) {
    %c0_i32 = arith.constant 0 : i32
    %c0_i32_0 = arith.constant 0 : i32
    %c0_i32_1 = arith.constant 0 : i32
    return %c0_i32, %c0_i32_0 : i32, i32
  }
  func.func @transform_15(%arg0: i32) -> (i32, i32) {
    %c0_i32 = arith.constant 0 : i32
    %c0_i32_0 = arith.constant 0 : i32
    %c0_i32_1 = arith.constant 0 : i32
    return %c0_i32, %c0_i32_0 : i32, i32
  }
  func.func @transform_16(%arg0: i32) -> (i32, i32) {
    %c0_i32 = arith.constant 0 : i32
    %c0_i32_0 = arith.constant 0 : i32
    %c0_i32_1 = arith.constant 0 : i32
    return %c0_i32, %c0_i32_0 : i32, i32
  }
  func.func @transform_17(%arg0: i32) -> (i32, i32) {
    %c0_i32 = arith.constant 0 : i32
    %c0_i32_0 = arith.constant 0 : i32
    %c0_i32_1 = arith.constant 0 : i32
    return %c0_i32, %c0_i32_0 : i32, i32
  }
  func.func @transform_18(%arg0: i32) -> (i32, i32, i32) {
    %c0_i32 = arith.constant 0 : i32
    %c0_i32_0 = arith.constant 0 : i32
    %c0_i32_1 = arith.constant 0 : i32
    %c0_i32_2 = arith.constant 0 : i32
    return %c0_i32, %c0_i32_0, %c0_i32_1 : i32, i32, i32
  }
  func.func @transform_19(%arg0: i32) -> (i32, i32) {
    %c0_i32 = arith.constant 0 : i32
    %c0_i32_0 = arith.constant 0 : i32
    %c0_i32_1 = arith.constant 0 : i32
    return %c0_i32, %c0_i32_0 : i32, i32
  }
  func.func @transform_20(%arg0: i32) -> (i32, i32, i32) {
    %c0_i32 = arith.constant 0 : i32
    %c0_i32_0 = arith.constant 0 : i32
    %c0_i32_1 = arith.constant 0 : i32
    %c0_i32_2 = arith.constant 0 : i32
    return %c0_i32, %c0_i32_0, %c0_i32_1 : i32, i32, i32
  }
  func.func @transform_21(%arg0: i32) -> (i32, i32) {
    %c0_i32 = arith.constant 0 : i32
    %c0_i32_0 = arith.constant 0 : i32
    %c0_i32_1 = arith.constant 0 : i32
    return %c0_i32, %c0_i32_0 : i32, i32
  }
  func.func @transform_22(%arg0: i32) -> (i32, i32, i32) {
    %c0_i32 = arith.constant 0 : i32
    %c0_i32_0 = arith.constant 0 : i32
    %c0_i32_1 = arith.constant 0 : i32
    %c0_i32_2 = arith.constant 0 : i32
    return %c0_i32, %c0_i32_0, %c0_i32_1 : i32, i32, i32
  }
  func.func @transform_23(%arg0: i32) -> (i32, i32) {
    %c0_i32 = arith.constant 0 : i32
    %c0_i32_0 = arith.constant 0 : i32
    %c0_i32_1 = arith.constant 0 : i32
    return %c0_i32, %c0_i32_0 : i32, i32
  }
  func.func @transform_24(%arg0: i32) -> (i32, i32, i32) {
    %c0_i32 = arith.constant 0 : i32
    %c0_i32_0 = arith.constant 0 : i32
    %c0_i32_1 = arith.constant 0 : i32
    %c0_i32_2 = arith.constant 0 : i32
    return %c0_i32, %c0_i32_0, %c0_i32_1 : i32, i32, i32
  }
  func.func @transform_25(%arg0: i32) -> (i32, i32) {
    %c0_i32 = arith.constant 0 : i32
    %c0_i32_0 = arith.constant 0 : i32
    %c0_i32_1 = arith.constant 0 : i32
    return %c0_i32, %c0_i32_0 : i32, i32
  }
  func.func @transform_26(%arg0: i32) -> (i32, i32, i32) {
    %c0_i32 = arith.constant 0 : i32
    %c0_i32_0 = arith.constant 0 : i32
    %c0_i32_1 = arith.constant 0 : i32
    %c0_i32_2 = arith.constant 0 : i32
    return %c0_i32, %c0_i32_0, %c0_i32_1 : i32, i32, i32
  }
  func.func @transform_27(%arg0: i32) -> (i32, i32) {
    %c0_i32 = arith.constant 0 : i32
    %c0_i32_0 = arith.constant 0 : i32
    %c0_i32_1 = arith.constant 0 : i32
    return %c0_i32, %c0_i32_0 : i32, i32
  }
  func.func @transform_28(%arg0: i32) -> (i32, i32) {
    %c0_i32 = arith.constant 0 : i32
    %c0_i32_0 = arith.constant 0 : i32
    %c0_i32_1 = arith.constant 0 : i32
    return %c0_i32, %c0_i32_0 : i32, i32
  }
  func.func @transform_29(%arg0: i32) -> (i32, i32) {
    %c0_i32 = arith.constant 0 : i32
    %c0_i32_0 = arith.constant 0 : i32
    %c0_i32_1 = arith.constant 0 : i32
    return %c0_i32, %c0_i32_0 : i32, i32
  }
  func.func @transform_30(%arg0: i32) -> (i32, i32) {
    %c0_i32 = arith.constant 0 : i32
    %c0_i32_0 = arith.constant 0 : i32
    %c0_i32_1 = arith.constant 0 : i32
    return %c0_i32, %c0_i32_0 : i32, i32
  }
  func.func @transform_31(%arg0: i32) -> (i32, i32) {
    %c0_i32 = arith.constant 0 : i32
    %c0_i32_0 = arith.constant 0 : i32
    %c0_i32_1 = arith.constant 0 : i32
    return %c0_i32, %c0_i32_0 : i32, i32
  }
  func.func @transform_32(%arg0: i32) -> (i32, i32) {
    %c0_i32 = arith.constant 0 : i32
    %c0_i32_0 = arith.constant 0 : i32
    %c0_i32_1 = arith.constant 0 : i32
    return %c0_i32, %c0_i32_0 : i32, i32
  }
}

</mosaic_0001>

<llo_original>
// kernel: dcmbs_forward.1
$region0: #{dcmbs_forward.1}
  #allocation0 [shape = 'u32[]', space=smem, size = 0x4, offset = 0x4, fixed_abs, tag = 'smem constant byte address 0x4 - core index']
  #allocation1 [shape = 'u32[72,128]{1,0:T(1,128)}', space=vmem, size = 0x9000, scoped, tag = 'internal scratch']
  %s0 = inlined_call_operand.smem [shape: u32[33], index: -1, kind: input, shape index: {}]
  %s1 = sld [smem:[%s0]]
  %s2 = scalar_lea.smem %s0, 1
  %s3 = sld [smem:[%s2]]
  %s4 = scalar_lea.smem %s0, 2
  %s5 = sld [smem:[%s4]]
  %s6 = scalar_lea.smem %s0, 3
  %s7 = sld [smem:[%s6]]
  %s8 = scalar_lea.smem %s0, 4
  %s9 = sld [smem:[%s8]]
  %s10 = scalar_lea.smem %s0, 5
  %s11 = sld [smem:[%s10]]
  %s12 = scalar_lea.smem %s0, 6
  %s13 = sld [smem:[%s12]]
  %s14 = scalar_lea.smem %s0, 7
  %s15 = sld [smem:[%s14]]
  %s16 = scalar_lea.smem %s0, 8
  %s17 = sld [smem:[%s16]]
  %s18 = scalar_lea.smem %s0, 9
  %s19 = sld [smem:[%s18]]
  %s20 = scalar_lea.smem %s0, 10
  %s21 = sld [smem:[%s20]]
  %s22 = scalar_lea.smem %s0, 11
  %s23 = sld [smem:[%s22]]
  %s24 = scalar_lea.smem %s0, 12
  %s25 = sld [smem:[%s24]]
  %s26 = scalar_lea.smem %s0, 13
  %s27 = sld [smem:[%s26]]
  %s28 = scalar_lea.smem %s0, 14
  %s29 = sld [smem:[%s28]]
  %s30 = scalar_lea.smem %s0, 15
  %s31 = sld [smem:[%s30]]
  %s32 = scalar_lea.smem %s0, 16
  %s33 = sld [smem:[%s32]]
  %s34 = scalar_lea.smem %s0, 17
  %s35 = sld [smem:[%s34]]
  %s36 = scalar_lea.smem %s0, 18
  %s37 = sld [smem:[%s36]]
  %s38 = scalar_lea.smem %s0, 19
  %s39 = sld [smem:[%s38]]
  %s40 = scalar_lea.smem %s0, 20
  %s41 = sld [smem:[%s40]]
  %s42 = scalar_lea.smem %s0, 21
  %s43 = sld [smem:[%s42]]
  %s44 = scalar_lea.smem %s0, 22
  %s45 = sld [smem:[%s44]]
  %s46 = scalar_lea.smem %s0, 23
  %s47 = sld [smem:[%s46]]
  %s48 = scalar_lea.smem %s0, 24
  %s49 = sld [smem:[%s48]]
  %s50 = scalar_lea.smem %s0, 25
  %s51 = sld [smem:[%s50]]
  %s52 = scalar_lea.smem %s0, 26
  %s53 = sld [smem:[%s52]]
  %s54 = scalar_lea.smem %s0, 27
  %s55 = sld [smem:[%s54]]
  %s56 = scalar_lea.smem %s0, 28
  %s57 = sld [smem:[%s56]]
  %s58 = scalar_lea.smem %s0, 29
  %s59 = sld [smem:[%s58]]
  %s60 = scalar_lea.smem %s0, 30
  %s61 = sld [smem:[%s60]]
  %s62 = scalar_lea.smem %s0, 31
  %s63 = sld [smem:[%s62]]
  %s64 = scalar_lea.smem %s0, 32
  %s65 = sld [smem:[%s64]]
  %66 = xla_tuple %s59, %s61, %s63, %s65
  %s67 = sld [smem:[#allocation0]]
  $region182: #{dcmbs_forward.1} parent=0
    _
  %s69 = ssub.s32 1, %s67
  %s70 = scalar_select 0, %s69, %s67
  $region1: #{dcmbs_forward.1} parent=0
    #allocation2 [shape = 'u8[512]{0}', space=vmem, size = 0x400, scoped, tag = 'input window, operand 13, single buffered']
    #allocation3 [shape = 's32[1]{0}', space=sflag, size = 0x4, scoped, tag = 'scoped memory for dcmbs_forward.1']
    #allocation4 [shape = 's32[1]{0}', space=sflag, size = 0x4, scoped, tag = 'scoped memory for dcmbs_forward.1']
    #allocation5 [shape = 'u8[512]{0}', space=vmem, size = 0x400, scoped, tag = 'input window, operand 15, single buffered']
    #allocation6 [shape = 's32[1]{0}', space=sflag, size = 0x4, scoped, tag = 'scoped memory for dcmbs_forward.1']
    #allocation7 [shape = 'u8[512]{0}', space=vmem, size = 0x400, scoped, tag = 'input window, operand 17, single buffered']
    #allocation8 [shape = 'u8[512]{0}', space=vmem, size = 0x400, scoped, tag = 'input window, operand 19, single buffered']
    #allocation9 [shape = 's32[1]{0}', space=sflag, size = 0x4, scoped, tag = 'scoped memory for dcmbs_forward.1']
    #allocation10 [shape = 'u8[512]{0}', space=vmem, size = 0x400, scoped, tag = 'input window, operand 21, single buffered']
    #allocation11 [shape = 'u8[512]{0}', space=vmem, size = 0x400, scoped, tag = 'input window, operand 23, single buffered']
    #allocation12 [shape = 's32[1]{0}', space=sflag, size = 0x4, scoped, tag = 'scoped memory for dcmbs_forward.1']
    #allocation13 [shape = 'u8[512]{0}', space=vmem, size = 0x400, scoped, tag = 'input window, operand 25, single buffered']
    #allocation14 [shape = 'u8[512]{0}', space=vmem, size = 0x400, scoped, tag = 'input window, operand 27, single buffered']
    #allocation15 [shape = 's32[1]{0}', space=sflag, size = 0x4, scoped, tag = 'scoped memory for dcmbs_forward.1']
    #allocation16 [shape = 'u8[8192]{0}', space=vmem, size = 0x2000, scoped, tag = 'output window, operand 0, single buffered']
    #allocation17 [shape = 'u8[8192]{0}', space=vmem, size = 0x2000, scoped, tag = 'output window, operand 3, single buffered']
    #allocation18 [shape = 's32[1]{0}', space=sflag, size = 0x4, scoped, tag = 'scoped memory for dcmbs_forward.1']
    %71 = vsyncpa [#allocation3], 0
    %72 = vsyncpa [#allocation6], 0
    %73 = vsyncpa [#allocation9], 0
    %74 = vsyncpa [#allocation12], 0
    %75 = vsyncpa [#allocation15], 0
    %76 = vsyncpa [#allocation4], 0
    %77 = vsyncpa [#allocation18], 0
    // Predicated region
    $region2: #{dcmbs_forward.1} parent=1 // pred_check
      _
    $region3: #{dcmbs_forward.1} parent=1 // pred_check_branch
      %79 = sbr.rel (0) target = $region5
    $region4: #{dcmbs_forward.1} parent=1 // pred_region
      _
    $region5: #{dcmbs_forward.1} parent=1 // pred_fallthru
      _
    // Predicated region
    $region6: #{dcmbs_forward.1} parent=1 // pred_check
      _
    $region7: #{dcmbs_forward.1} parent=1 // pred_check_branch
      %81 = sbr.rel (0) target = $region9
    $region8: #{dcmbs_forward.1} parent=1 // pred_region
      _
    $region9: #{dcmbs_forward.1} parent=1 // pred_fallthru
      _
    // Predicated region
    $region10: #{dcmbs_forward.1} parent=1 // pred_check
      _
    $region11: #{dcmbs_forward.1} parent=1 // pred_check_branch
      %83 = sbr.rel (0) target = $region13
    $region12: #{dcmbs_forward.1} parent=1 // pred_region
      _
    $region13: #{dcmbs_forward.1} parent=1 // pred_fallthru
      _
    // Predicated region
    $region14: #{dcmbs_forward.1} parent=1 // pred_check
      _
    $region15: #{dcmbs_forward.1} parent=1 // pred_check_branch
      %85 = sbr.rel (0) target = $region17
    $region16: #{dcmbs_forward.1} parent=1 // pred_region
      _
    $region17: #{dcmbs_forward.1} parent=1 // pred_fallthru
      _
    // Predicated region
    $region18: #{dcmbs_forward.1} parent=1 // pred_check
      _
    $region19: #{dcmbs_forward.1} parent=1 // pred_check_branch
      %87 = sbr.rel (0) target = $region21
    $region20: #{dcmbs_forward.1} parent=1 // pred_region
      _
    $region21: #{dcmbs_forward.1} parent=1 // pred_fallthru
      _
    // Predicated region
    $region22: #{dcmbs_forward.1} parent=1 // pred_check
      _
    $region23: #{dcmbs_forward.1} parent=1 // pred_check_branch
      %89 = sbr.rel (0) target = $region25
    $region24: #{dcmbs_forward.1} parent=1 // pred_region
      _
    $region25: #{dcmbs_forward.1} parent=1 // pred_fallthru
      _
    // Predicated region
    $region26: #{dcmbs_forward.1} parent=1 // pred_check
      _
    $region27: #{dcmbs_forward.1} parent=1 // pred_check_branch
      %91 = sbr.rel (0) target = $region29
    $region28: #{dcmbs_forward.1} parent=1 // pred_region
      _
    $region29: #{dcmbs_forward.1} parent=1 // pred_fallthru
      _
    // Predicated region
    $region30: #{dcmbs_forward.1} parent=1 // pred_check
      _
    $region31: #{dcmbs_forward.1} parent=1 // pred_check_branch
      %93 = sbr.rel (0) target = $region33
    $region32: #{dcmbs_forward.1} parent=1 // pred_region
      _
    $region33: #{dcmbs_forward.1} parent=1 // pred_fallthru
      _
    // Predicated region
    $region34: #{dcmbs_forward.1} parent=1 // pred_check
      _
    $region35: #{dcmbs_forward.1} parent=1 // pred_check_branch
      %95 = sbr.rel (0) target = $region37
    $region36: #{dcmbs_forward.1} parent=1 // pred_region
      _
    $region37: #{dcmbs_forward.1} parent=1 // pred_fallthru
      _
    // Predicated region
    $region38: #{dcmbs_forward.1} parent=1 // pred_check
      _
    $region39: #{dcmbs_forward.1} parent=1 // pred_check_branch
      %97 = sbr.rel (0) target = $region41
    $region40: #{dcmbs_forward.1} parent=1 // pred_region
      _
    $region41: #{dcmbs_forward.1} parent=1 // pred_fallthru
      _
    // Predicated region
    $region42: #{dcmbs_forward.1} parent=1 // pred_check
      _
    $region43: #{dcmbs_forward.1} parent=1 // pred_check_branch
      %99 = sbr.rel (0) target = $region45
    $region44: #{dcmbs_forward.1} parent=1 // pred_region
      _
    $region45: #{dcmbs_forward.1} parent=1 // pred_fallthru
      _
    // Predicated region
    $region46: #{dcmbs_forward.1} parent=1 // pred_check
      _
    $region47: #{dcmbs_forward.1} parent=1 // pred_check_branch
      %101 = sbr.rel (0) target = $region49
    $region48: #{dcmbs_forward.1} parent=1 // pred_region
      _
    $region49: #{dcmbs_forward.1} parent=1 // pred_fallthru
      _
    // Predicated region
    $region50: #{dcmbs_forward.1} parent=1 // pred_check
      _
    $region51: #{dcmbs_forward.1} parent=1 // pred_check_branch
      %103 = sbr.rel (0) target = $region53
    $region52: #{dcmbs_forward.1} parent=1 // pred_region
      _
    $region53: #{dcmbs_forward.1} parent=1 // pred_fallthru
      _
    // Predicated region
    $region54: #{dcmbs_forward.1} parent=1 // pred_check
      _
    $region55: #{dcmbs_forward.1} parent=1 // pred_check_branch
      %105 = sbr.rel (0) target = $region57
    $region56: #{dcmbs_forward.1} parent=1 // pred_region
      %107 = vsyncadd [#allocation3], 0
      %s109 = sshll.u32 %s27, 4
      %s110 = int_to_ptr.hbm [resolvable:$true] %s109
      %s111 = sshll.u32 [#allocation2], 4
      %s112 = int_to_ptr.vmem [resolvable:$true] %s111
      %114 = dma.hbm_to_vmem [thread:$0]  %s110, 16, %s112, [#allocation3]
    $region57: #{dcmbs_forward.1} parent=1 // pred_fallthru
      _
    // Predicated region
    $region58: #{dcmbs_forward.1} parent=1 // pred_check
      _
    $region59: #{dcmbs_forward.1} parent=1 // pred_check_branch
      %116 = sbr.rel (0) target = $region61
    $region60: #{dcmbs_forward.1} parent=1 // pred_region
      _
    $region61: #{dcmbs_forward.1} parent=1 // pred_fallthru
      _
    // Predicated region
    $region62: #{dcmbs_forward.1} parent=1 // pred_check
      _
    $region63: #{dcmbs_forward.1} parent=1 // pred_check_branch
      %118 = sbr.rel (0) target = $region65
    $region64: #{dcmbs_forward.1} parent=1 // pred_region
      %120 = vsyncadd [#allocation6], 0
      %s122 = sshll.u32 %s31, 4
      %s123 = int_to_ptr.hbm [resolvable:$true] %s122
      %s124 = sshll.u32 [#allocation5], 4
      %s125 = int_to_ptr.vmem [resolvable:$true] %s124
      %127 = dma.hbm_to_vmem [thread:$0]  %s123, 16, %s125, [#allocation6]
    $region65: #{dcmbs_forward.1} parent=1 // pred_fallthru
      _
    // Predicated region
    $region66: #{dcmbs_forward.1} parent=1 // pred_check
      _
    $region67: #{dcmbs_forward.1} parent=1 // pred_check_branch
      %129 = sbr.rel (0) target = $region69
    $region68: #{dcmbs_forward.1} parent=1 // pred_region
      _
    $region69: #{dcmbs_forward.1} parent=1 // pred_fallthru
      _
    // Predicated region
    $region70: #{dcmbs_forward.1} parent=1 // pred_check
      _
    $region71: #{dcmbs_forward.1} parent=1 // pred_check_branch
      %131 = sbr.rel (0) target = $region73
    $region72: #{dcmbs_forward.1} parent=1 // pred_region
      %133 = vsyncadd [#allocation6], 0
      %s135 = sshll.u32 %s35, 4
      %s136 = int_to_ptr.hbm [resolvable:$true] %s135
      %s137 = sshll.u32 [#allocation7], 4
      %s138 = int_to_ptr.vmem [resolvable:$true] %s137
      %140 = dma.hbm_to_vmem [thread:$0]  %s136, 16, %s138, [#allocation6]
    $region73: #{dcmbs_forward.1} parent=1 // pred_fallthru
      _
    // Predicated region
    $region74: #{dcmbs_forward.1} parent=1 // pred_check
      _
    $region75: #{dcmbs_forward.1} parent=1 // pred_check_branch
      %142 = sbr.rel (0) target = $region77
    $region76: #{dcmbs_forward.1} parent=1 // pred_region
      _
    $region77: #{dcmbs_forward.1} parent=1 // pred_fallthru
      _
    // Predicated region
    $region78: #{dcmbs_forward.1} parent=1 // pred_check
      _
    $region79: #{dcmbs_forward.1} parent=1 // pred_check_branch
      %144 = sbr.rel (0) target = $region81
    $region80: #{dcmbs_forward.1} parent=1 // pred_region
      %146 = vsyncadd [#allocation9], 0
      %s148 = sshll.u32 %s39, 4
      %s149 = int_to_ptr.hbm [resolvable:$true] %s148
      %s150 = sshll.u32 [#allocation8], 4
      %s151 = int_to_ptr.vmem [resolvable:$true] %s150
      %153 = dma.hbm_to_vmem [thread:$0]  %s149, 16, %s151, [#allocation9]
    $region81: #{dcmbs_forward.1} parent=1 // pred_fallthru
      _
    // Predicated region
    $region82: #{dcmbs_forward.1} parent=1 // pred_check
      _
    $region83: #{dcmbs_forward.1} parent=1 // pred_check_branch
      %155 = sbr.rel (0) target = $region85
    $region84: #{dcmbs_forward.1} parent=1 // pred_region
      _
    $region85: #{dcmbs_forward.1} parent=1 // pred_fallthru
      _
    // Predicated region
    $region86: #{dcmbs_forward.1} parent=1 // pred_check
      _
    $region87: #{dcmbs_forward.1} parent=1 // pred_check_branch
      %157 = sbr.rel (0) target = $region89
    $region88: #{dcmbs_forward.1} parent=1 // pred_region
      %159 = vsyncadd [#allocation9], 0
      %s161 = sshll.u32 %s43, 4
      %s162 = int_to_ptr.hbm [resolvable:$true] %s161
      %s163 = sshll.u32 [#allocation10], 4
      %s164 = int_to_ptr.vmem [resolvable:$true] %s163
      %166 = dma.hbm_to_vmem [thread:$0]  %s162, 16, %s164, [#allocation9]
    $region89: #{dcmbs_forward.1} parent=1 // pred_fallthru
      _
    // Predicated region
    $region90: #{dcmbs_forward.1} parent=1 // pred_check
      _
    $region91: #{dcmbs_forward.1} parent=1 // pred_check_branch
      %168 = sbr.rel (0) target = $region93
    $region92: #{dcmbs_forward.1} parent=1 // pred_region
      _
    $region93: #{dcmbs_forward.1} parent=1 // pred_fallthru
      _
    // Predicated region
    $region94: #{dcmbs_forward.1} parent=1 // pred_check
      _
    $region95: #{dcmbs_forward.1} parent=1 // pred_check_branch
      %170 = sbr.rel (0) target = $region97
    $region96: #{dcmbs_forward.1} parent=1 // pred_region
      %172 = vsyncadd [#allocation12], 0
      %s174 = sshll.u32 %s47, 4
      %s175 = int_to_ptr.hbm [resolvable:$true] %s174
      %s176 = sshll.u32 [#allocation11], 4
      %s177 = int_to_ptr.vmem [resolvable:$true] %s176
      %179 = dma.hbm_to_vmem [thread:$0]  %s175, 16, %s177, [#allocation12]
    $region97: #{dcmbs_forward.1} parent=1 // pred_fallthru
      _
    // Predicated region
    $region98: #{dcmbs_forward.1} parent=1 // pred_check
      _
    $region99: #{dcmbs_forward.1} parent=1 // pred_check_branch
      %181 = sbr.rel (0) target = $region101
    $region100: #{dcmbs_forward.1} parent=1 // pred_region
      _
    $region101: #{dcmbs_forward.1} parent=1 // pred_fallthru
      _
    // Predicated region
    $region102: #{dcmbs_forward.1} parent=1 // pred_check
      _
    $region103: #{dcmbs_forward.1} parent=1 // pred_check_branch
      %183 = sbr.rel (0) target = $region105
    $region104: #{dcmbs_forward.1} parent=1 // pred_region
      %185 = vsyncadd [#allocation12], 0
      %s187 = sshll.u32 %s51, 4
      %s188 = int_to_ptr.hbm [resolvable:$true] %s187
      %s189 = sshll.u32 [#allocation13], 4
      %s190 = int_to_ptr.vmem [resolvable:$true] %s189
      %192 = dma.hbm_to_vmem [thread:$0]  %s188, 16, %s190, [#allocation12]
    $region105: #{dcmbs_forward.1} parent=1 // pred_fallthru
      _
    // Predicated region
    $region106: #{dcmbs_forward.1} parent=1 // pred_check
      _
    $region107: #{dcmbs_forward.1} parent=1 // pred_check_branch
      %194 = sbr.rel (0) target = $region109
    $region108: #{dcmbs_forward.1} parent=1 // pred_region
      _
    $region109: #{dcmbs_forward.1} parent=1 // pred_fallthru
      _
    // Predicated region
    $region110: #{dcmbs_forward.1} parent=1 // pred_check
      _
    $region111: #{dcmbs_forward.1} parent=1 // pred_check_branch
      %196 = sbr.rel (0) target = $region113
    $region112: #{dcmbs_forward.1} parent=1 // pred_region
      %198 = vsyncadd [#allocation15], 0
      %s200 = sshll.u32 %s55, 4
      %s201 = int_to_ptr.hbm [resolvable:$true] %s200
      %s202 = sshll.u32 [#allocation14], 4
      %s203 = int_to_ptr.vmem [resolvable:$true] %s202
      %205 = dma.hbm_to_vmem [thread:$0]  %s201, 16, %s203, [#allocation15]
    $region113: #{dcmbs_forward.1} parent=1 // pred_fallthru
      _
    // Predicated region
    $region114: #{dcmbs_forward.1} parent=1 // pred_check
      _
    $region115: #{dcmbs_forward.1} parent=1 // pred_check_branch
      %207 = sbr.rel (0) target = $region117
    $region116: #{dcmbs_forward.1} parent=1 // pred_region
      _
    $region117: #{dcmbs_forward.1} parent=1 // pred_fallthru
      _
    // Predicated region
    $region118: #{dcmbs_forward.1} parent=1 // pred_check
      _
    $region119: #{dcmbs_forward.1} parent=1 // pred_check_branch
      %209 = sbr.rel (0) target = $region121
    $region120: #{dcmbs_forward.1} parent=1 // pred_region
      %211 = dma.done [#allocation3], 16
    $region121: #{dcmbs_forward.1} parent=1 // pred_fallthru
      _
    // Predicated region
    $region122: #{dcmbs_forward.1} parent=1 // pred_check
      _
    $region123: #{dcmbs_forward.1} parent=1 // pred_check_branch
      %213 = sbr.rel (0) target = $region125
    $region124: #{dcmbs_forward.1} parent=1 // pred_region
      %215 = dma.done [#allocation6], 16
    $region125: #{dcmbs_forward.1} parent=1 // pred_fallthru
      _
    // Predicated region
    $region126: #{dcmbs_forward.1} parent=1 // pred_check
      _
    $region127: #{dcmbs_forward.1} parent=1 // pred_check_branch
      %217 = sbr.rel (0) target = $region129
    $region128: #{dcmbs_forward.1} parent=1 // pred_region
      %219 = dma.done [#allocation6], 16
    $region129: #{dcmbs_forward.1} parent=1 // pred_fallthru
      _
    // Predicated region
    $region130: #{dcmbs_forward.1} parent=1 // pred_check
      _
    $region131: #{dcmbs_forward.1} parent=1 // pred_check_branch
      %221 = sbr.rel (0) target = $region133
    $region132: #{dcmbs_forward.1} parent=1 // pred_region
      %223 = dma.done [#allocation9], 16
    $region133: #{dcmbs_forward.1} parent=1 // pred_fallthru
      _
    // Predicated region
    $region134: #{dcmbs_forward.1} parent=1 // pred_check
      _
    $region135: #{dcmbs_forward.1} parent=1 // pred_check_branch
      %225 = sbr.rel (0) target = $region137
    $region136: #{dcmbs_forward.1} parent=1 // pred_region
      %227 = dma.done [#allocation9], 16
    $region137: #{dcmbs_forward.1} parent=1 // pred_fallthru
      _
    // Predicated region
    $region138: #{dcmbs_forward.1} parent=1 // pred_check
      _
    $region139: #{dcmbs_forward.1} parent=1 // pred_check_branch
      %229 = sbr.rel (0) target = $region141
    $region140: #{dcmbs_forward.1} parent=1 // pred_region
      %231 = dma.done [#allocation12], 16
    $region141: #{dcmbs_forward.1} parent=1 // pred_fallthru
      _
    // Predicated region
    $region142: #{dcmbs_forward.1} parent=1 // pred_check
      _
    $region143: #{dcmbs_forward.1} parent=1 // pred_check_branch
      %233 = sbr.rel (0) target = $region145
    $region144: #{dcmbs_forward.1} parent=1 // pred_region
      %235 = dma.done [#allocation12], 16
    $region145: #{dcmbs_forward.1} parent=1 // pred_fallthru
      _
    // Predicated region
    $region146: #{dcmbs_forward.1} parent=1 // pred_check
      _
    $region147: #{dcmbs_forward.1} parent=1 // pred_check_branch
      %237 = sbr.rel (0) target = $region149
    $region148: #{dcmbs_forward.1} parent=1 // pred_region
      %239 = dma.done [#allocation15], 16
    $region149: #{dcmbs_forward.1} parent=1 // pred_fallthru
      _
    %v241 = vld [vmem:[%s1] sm:$0xff]
    %v242 = vld [vmem:[%s1 + $0x8] sm:$0xff]
    %v243 = vld [vmem:[%s3] sm:$0xff]
    %v244 = vld [vmem:[%s3 + $0x8] sm:$0xff]
    %v245 = vpack.c.bf16 %v244, %v243
    %v246 = vld [vmem:[%s5] sm:$0xff]
    %v247 = vld [vmem:[%s5 + $0x8] sm:$0xff]
    %v248 = vld [vmem:[%s5 + $0x10] sm:$0xff]
    %v249 = vld [vmem:[%s5 + $0x18] sm:$0xff]
    %v250 = vpack.c.bf16 %v242, %v241
    %v251 = vpack.c.bf16 %v247, %v246
    %v252 = vpack.c.bf16 %v249, %v248
    %v253 = vld [vmem:[%s7] sm:$0x1]
    %v255 = vperm.slane %v253, 0
    %vm257 = vcmask 261120
    %v259 = vsel %vm257, %v250, 0
    %261 = vmatpush.bf16.msra.mxu0 0
    %262 = vmatpush.bf16.msra.mxu0 0
    %263 = vmatpush.bf16.msra.mxu0 0
    %264 = vmatpush.bf16.msra.mxu0 0
    %265 = vmatpush.bf16.msra.mxu0 0
    %266 = vmatpush.bf16.msra.mxu0 0
    %267 = vmatpush.bf16.msra.mxu0 %v252
    %268 = vmatpush.bf16.msra.mxu0 %v251
    %269 = vmatmul.bf16.gmra.mxu0 %v259
    %v270 = vpop.f32.mrf.mxu0
    %v271 = vadd.f32 %v255, %v270
    %v272 = vpop.f32.mrf.mxu0
    %v273 = vadd.f32 %v255, %v272
    %274 = vdwg.mxu0
    %v275 = vmax.f32 %v271, 0.0
    %v276 = vmax.f32 %v273, 0.0
    %v277 = vld [vmem:[%s9] sm:$0xff]
    %v278 = vld [vmem:[%s9 + $0x8] sm:$0xff]
    %v279 = vld [vmem:[%s9 + $0x10] sm:$0xff]
    %v280 = vld [vmem:[%s9 + $0x18] sm:$0xff]
    %v281 = vld [vmem:[%s9 + $0x20] sm:$0xff]
    %v282 = vld [vmem:[%s9 + $0x28] sm:$0xff]
    %v283 = vld [vmem:[%s9 + $0x30] sm:$0xff]
    %v284 = vld [vmem:[%s9 + $0x38] sm:$0xff]
    %v285 = vpack.c.bf16 %v276, %v275
    %v286 = vpack.c.bf16 %v278, %v277
    %v287 = vpack.c.bf16 %v280, %v279
    %v288 = vpack.c.bf16 %v282, %v281
    %v289 = vpack.c.bf16 %v284, %v283
    %v290 = vld [vmem:[%s11] sm:$0x1]
    %v292 = vperm.slane %v290, 0
    %vm294 = vcmask 523264
    %v296 = vsel %vm294, %v285, 0
    %298 = vmatpush.bf16.msra.mxu0 0
    %299 = vmatpush.bf16.msra.mxu0 0
    %300 = vmatpush.bf16.msra.mxu0 0
    %301 = vmatpush.bf16.msra.mxu0 0
    %302 = vmatpush.bf16.msra.mxu0 %v289
    %303 = vmatpush.bf16.msra.mxu0 %v288
    %304 = vmatpush.bf16.msra.mxu0 %v287
    %305 = vmatpush.bf16.msra.mxu0 %v286
    %306 = vmatmul.bf16.gmra.mxu0 %v296
    %v307 = vpop.f32.mrf.mxu0
    %v308 = vadd.f32 %v292, %v307
    %v309 = vpop.f32.mrf.mxu0
    %v310 = vadd.f32 %v292, %v309
    %311 = vdwg.mxu0
    %v312 = vmax.f32 %v308, 0.0
    %v313 = vmax.f32 %v310, 0.0
    %v314 = vld [vmem:[%s13] sm:$0xff]
    %v315 = vld [vmem:[%s13 + $0x8] sm:$0xff]
    %v316 = vld [vmem:[%s13 + $0x10] sm:$0xff]
    %v317 = vld [vmem:[%s13 + $0x18] sm:$0xff]
    %v318 = vld [vmem:[%s13 + $0x20] sm:$0xff]
    %v319 = vld [vmem:[%s13 + $0x28] sm:$0xff]
    %v320 = vld [vmem:[%s13 + $0x30] sm:$0xff]
    %v321 = vld [vmem:[%s13 + $0x38] sm:$0xff]
    %v322 = vpack.c.bf16 %v313, %v312
    %v323 = vpack.c.bf16 %v315, %v314
    %v324 = vpack.c.bf16 %v317, %v316
    %v325 = vpack.c.bf16 %v319, %v318
    %v326 = vpack.c.bf16 %v321, %v320
    %v327 = vld [vmem:[%s15] sm:$0x1]
    %v329 = vperm.slane %v327, 0
    %v332 = vsel %vm294, %v322, 0
    %334 = vmatpush.bf16.msra.mxu0 0
    %335 = vmatpush.bf16.msra.mxu0 0
    %336 = vmatpush.bf16.msra.mxu0 0
    %337 = vmatpush.bf16.msra.mxu0 0
    %338 = vmatpush.bf16.msra.mxu0 %v326
    %339 = vmatpush.bf16.msra.mxu0 %v325
    %340 = vmatpush.bf16.msra.mxu0 %v324
    %341 = vmatpush.bf16.msra.mxu0 %v323
    %342 = vmatmul.bf16.gmra.mxu0 %v332
    %v343 = vpop.f32.mrf.mxu0
    %v344 = vadd.f32 %v329, %v343
    %v345 = vpop.f32.mrf.mxu0
    %v346 = vadd.f32 %v329, %v345
    %347 = vdwg.mxu0
    %v348 = vmax.f32 %v344, 0.0
    %v349 = vmax.f32 %v346, 0.0
    %v350 = vld [vmem:[%s17] sm:$0xff]
    %v351 = vld [vmem:[%s17 + $0x8] sm:$0xff]
    %v352 = vld [vmem:[%s17 + $0x10] sm:$0xff]
    %v353 = vld [vmem:[%s17 + $0x18] sm:$0xff]
    %v354 = vpack.c.bf16 %v349, %v348
    %v355 = vpack.c.bf16 %v351, %v350
    %v356 = vpack.c.bf16 %v353, %v352
    %v357 = vld [vmem:[%s19] sm:$0x1]
    %v359 = vperm.slane %v357, 0
    %v362 = vsel %vm257, %v354, 0
    %364 = vmatpush.bf16.msra.mxu0 0
    %365 = vmatpush.bf16.msra.mxu0 0
    %366 = vmatpush.bf16.msra.mxu0 0
    %367 = vmatpush.bf16.msra.mxu0 0
    %368 = vmatpush.bf16.msra.mxu0 0
    %369 = vmatpush.bf16.msra.mxu0 0
    %370 = vmatpush.bf16.msra.mxu0 %v356
    %371 = vmatpush.bf16.msra.mxu0 %v355
    %372 = vmatmul.bf16.gmra.mxu0 %v362
    %v373 = vpop.f32.mrf.mxu0
    %v374 = vadd.f32 %v359, %v373
    %v375 = vpop.f32.mrf.mxu0
    %v376 = vadd.f32 %v359, %v375
    %377 = vdwg.mxu0
    %v378 = vld [vmem:[%s21] sm:$0xff]
    %v379 = vld [vmem:[%s21 + $0x8] sm:$0xff]
    %v380 = vpack.c.bf16 %v376, %v374
    %v381 = vpack.c.bf16 %v379, %v378
    %v382 = vld [vmem:[%s23] sm:$0x1]
    %v384 = vperm.slane %v382, 0
    %vm386 = vcmask 130048
    %v388 = vsel %vm386, %v380, 0
    %390 = vmatpush.bf16.msra.mxu0 0
    %391 = vmatpush.bf16.msra.mxu0 0
    %392 = vmatpush.bf16.msra.mxu0 0
    %393 = vmatpush.bf16.msra.mxu0 0
    %394 = vmatpush.bf16.msra.mxu0 0
    %395 = vmatpush.bf16.msra.mxu0 0
    %396 = vmatpush.bf16.msra.mxu0 0
    %397 = vmatpush.bf16.msra.mxu0 %v381
    %398 = vmatmul.bf16.gmra.mxu0 %v388
    %v399 = vpop.f32.mrf.mxu0
    %v400 = vadd.f32 %v384, %v399
    %v401 = vpop.f32.mrf.mxu0
    %v402 = vadd.f32 %v384, %v401
    %403 = vdwg.mxu0
    %v404 = vmax.f32 %v400, 0.0
    %v405 = vmax.f32 %v402, 0.0
    %v406 = vld [vmem:[%s25] sm:$0xff]
    %v407 = vld [vmem:[%s25 + $0x8] sm:$0xff]
    %v408 = vld [vmem:[%s25 + $0x10] sm:$0xff]
    %v409 = vld [vmem:[%s25 + $0x18] sm:$0xff]
    %v410 = vpack.c.bf16 %v405, %v404
    %v411 = vpack.c.bf16 %v407, %v406
    %v412 = vpack.c.bf16 %v409, %v408
    %v413 = vld [vmem:[#allocation2] sm:$0x1]
    %v415 = vperm.slane %v413, 0
    %v418 = vsel %vm257, %v410, 0
    %420 = vmatpush.bf16.msra.mxu0 0
    %421 = vmatpush.bf16.msra.mxu0 0
    %422 = vmatpush.bf16.msra.mxu0 0
    %423 = vmatpush.bf16.msra.mxu0 0
    %424 = vmatpush.bf16.msra.mxu0 0
    %425 = vmatpush.bf16.msra.mxu0 0
    %426 = vmatpush.bf16.msra.mxu0 %v412
    %427 = vmatpush.bf16.msra.mxu0 %v411
    %428 = vmatmul.bf16.gmra.mxu0 %v418
    %v429 = vpop.f32.mrf.mxu0
    %v430 = vadd.f32 %v415, %v429
    %v431 = vpop.f32.mrf.mxu0
    %v432 = vadd.f32 %v415, %v431
    %433 = vdwg.mxu0
    %v434 = vmax.f32 %v430, 0.0
    %v435 = vmax.f32 %v432, 0.0
    %v436 = vld [vmem:[%s29] sm:$0xff]
    %v437 = vld [vmem:[%s29 + $0x8] sm:$0xff]
    %v438 = vld [vmem:[%s29 + $0x10] sm:$0xff]
    %v439 = vld [vmem:[%s29 + $0x18] sm:$0xff]
    %v440 = vld [vmem:[%s29 + $0x20] sm:$0xff]
    %v441 = vld [vmem:[%s29 + $0x28] sm:$0xff]
    %v442 = vld [vmem:[%s29 + $0x30] sm:$0xff]
    %v443 = vld [vmem:[%s29 + $0x38] sm:$0xff]
    %v444 = vpack.c.bf16 %v435, %v434
    %v445 = vpack.c.bf16 %v437, %v436
    %v446 = vpack.c.bf16 %v439, %v438
    %v447 = vpack.c.bf16 %v441, %v440
    %v448 = vpack.c.bf16 %v443, %v442
    %v449 = vld [vmem:[#allocation5] sm:$0x1]
    %v451 = vperm.slane %v449, 0
    %v454 = vsel %vm294, %v444, 0
    %456 = vmatpush.bf16.msra.mxu0 0
    %457 = vmatpush.bf16.msra.mxu0 0
    %458 = vmatpush.bf16.msra.mxu0 0
    %459 = vmatpush.bf16.msra.mxu0 0
    %460 = vmatpush.bf16.msra.mxu0 %v448
    %461 = vmatpush.bf16.msra.mxu0 %v447
    %462 = vmatpush.bf16.msra.mxu0 %v446
    %463 = vmatpush.bf16.msra.mxu0 %v445
    %464 = vmatmul.bf16.gmra.mxu0 %v454
    %v465 = vpop.f32.mrf.mxu0
    %v466 = vadd.f32 %v451, %v465
    %v467 = vpop.f32.mrf.mxu0
    %v468 = vadd.f32 %v451, %v467
    %469 = vdwg.mxu0
    %v470 = vmax.f32 %v466, 0.0
    %v471 = vmax.f32 %v468, 0.0
    %v472 = vld [vmem:[%s33] sm:$0xff]
    %v473 = vld [vmem:[%s33 + $0x8] sm:$0xff]
    %v474 = vld [vmem:[%s33 + $0x10] sm:$0xff]
    %v475 = vld [vmem:[%s33 + $0x18] sm:$0xff]
    %v476 = vld [vmem:[%s33 + $0x20] sm:$0xff]
    %v477 = vld [vmem:[%s33 + $0x28] sm:$0xff]
    %v478 = vld [vmem:[%s33 + $0x30] sm:$0xff]
    %v479 = vld [vmem:[%s33 + $0x38] sm:$0xff]
    %v480 = vpack.c.bf16 %v471, %v470
    %v481 = vpack.c.bf16 %v473, %v472
    %v482 = vpack.c.bf16 %v475, %v474
    %v483 = vpack.c.bf16 %v477, %v476
    %v484 = vpack.c.bf16 %v479, %v478
    %v485 = vld [vmem:[#allocation7] sm:$0x1]
    %v487 = vperm.slane %v485, 0
    %v490 = vsel %vm294, %v480, 0
    %492 = vmatpush.bf16.msra.mxu0 0
    %493 = vmatpush.bf16.msra.mxu0 0
    %494 = vmatpush.bf16.msra.mxu0 0
    %495 = vmatpush.bf16.msra.mxu0 0
    %496 = vmatpush.bf16.msra.mxu0 %v484
    %497 = vmatpush.bf16.msra.mxu0 %v483
    %498 = vmatpush.bf16.msra.mxu0 %v482
    %499 = vmatpush.bf16.msra.mxu0 %v481
    %500 = vmatmul.bf16.gmra.mxu0 %v490
    %v501 = vpop.f32.mrf.mxu0
    %v502 = vadd.f32 %v487, %v501
    %v503 = vpop.f32.mrf.mxu0
    %v504 = vadd.f32 %v487, %v503
    %505 = vdwg.mxu0
    %506 = vst.msk [vmem:[#allocation16] sm:$0xff] %vm257, %v502
    %507 = vst.msk [vmem:[#allocation16 + $0x8] sm:$0xff] %vm257, %v504
    %508 = vst.msk [vmem:[#allocation17] sm:$0xff] %vm386, %v374
    %509 = vst.msk [vmem:[#allocation17 + $0x8] sm:$0xff] %vm386, %v376
    %v510 = vld [vmem:[%s37] sm:$0xff]
    %v511 = vld [vmem:[%s37 + $0x8] sm:$0xff]
    %v512 = vld [vmem:[%s37 + $0x10] sm:$0xff]
    %v513 = vld [vmem:[%s37 + $0x18] sm:$0xff]
    %v514 = vpack.c.bf16 %v511, %v510
    %v515 = vpack.c.bf16 %v513, %v512
    %v517 = vsel %vm386, %v245, 0
    %519 = vmatpush.bf16.msra.mxu0 0
    %520 = vmatpush.bf16.msra.mxu0 0
    %521 = vmatpush.bf16.msra.mxu0 0
    %522 = vmatpush.bf16.msra.mxu0 0
    %523 = vmatpush.bf16.msra.mxu0 0
    %524 = vmatpush.bf16.msra.mxu0 0
    %525 = vmatpush.bf16.msra.mxu0 0
    %526 = vmatpush.bf16.msra.mxu0 %v250
    %527 = vmatmul.bf16.gmra.mxu0 %v517
    %v528 = vpop.f32.mrf.mxu0
    %v529 = vadd.f32 0.0, %v528
    %v530 = vpop.f32.mrf.mxu0
    %v531 = vadd.f32 0.0, %v530
    %532 = vdwg.mxu0
    %s533 = scalar_lea.vmem %s37, 32
    %v534 = vld [vmem:[%s533] sm:$0xff]
    %v535 = vld [vmem:[%s533 + $0x8] sm:$0xff]
    %v536 = vld [vmem:[%s533 + $0x10] sm:$0xff]
    %v537 = vld [vmem:[%s533 + $0x18] sm:$0xff]
    %v538 = vpack.c.bf16 %v531, %v529
    %v539 = vpack.c.bf16 %v535, %v534
    %v540 = vpack.c.bf16 %v537, %v536
    %v542 = vsel %vm257, %v538, 0
    %544 = vmatpush.bf16.msra.mxu0 0
    %545 = vmatpush.bf16.msra.mxu0 0
    %546 = vmatpush.bf16.msra.mxu0 0
    %547 = vmatpush.bf16.msra.mxu0 0
    %548 = vmatpush.bf16.msra.mxu0 0
    %549 = vmatpush.bf16.msra.mxu0 0
    %550 = vmatpush.bf16.msra.mxu0 %v540
    %551 = vmatpush.bf16.msra.mxu0 %v539
    %552 = vmatmul.bf16.gmra.mxu0 %v542
    %v553 = vpop.f32.mrf.mxu0
    %v554 = vadd.f32 0.0, %v553
    %v555 = vpop.f32.mrf.mxu0
    %v556 = vadd.f32 0.0, %v555
    %557 = vdwg.mxu0
    %558 = vmatpush.bf16.msra.mxu0 0
    %559 = vmatpush.bf16.msra.mxu0 0
    %560 = vmatpush.bf16.msra.mxu0 0
    %561 = vmatpush.bf16.msra.mxu0 0
    %562 = vmatpush.bf16.msra.mxu0 0
    %563 = vmatpush.bf16.msra.mxu0 0
    %564 = vmatpush.bf16.msra.mxu0 %v515
    %565 = vmatpush.bf16.msra.mxu0 %v514
    %566 = vmatmul.bf16.gmra.mxu0 %v259
    %v567 = vpop.f32.mrf.mxu0
    %v568 = vadd.f32 %v554, %v567
    %v569 = vpop.f32.mrf.mxu0
    %v570 = vadd.f32 %v556, %v569
    %571 = vdwg.mxu0
    %572 = vmatpush.bf16.msra.mxu0 0
    %573 = vmatpush.bf16.msra.mxu0 0
    %574 = vmatpush.bf16.msra.mxu0 0
    %575 = vmatpush.bf16.msra.mxu0 0
    %576 = vmatpush.bf16.msra.mxu0 0
    %577 = vmatpush.bf16.msra.mxu0 0
    %578 = vmatpush.bf16.msra.mxu0 0
    %579 = vmatpush.bf16.msra.mxu0 %v538
    %580 = vmatmul.bf16.gmra.mxu0 %v517
    %v581 = vpop.f32.mrf.mxu0
    %v582 = vadd.f32 0.0, %v581
    %v583 = vpop.f32.mrf.mxu0
    %v584 = vadd.f32 0.0, %v583
    %585 = vdwg.mxu0
    %s586 = scalar_lea.vmem %s37, 64
    %v587 = vld [vmem:[%s586] sm:$0xff]
    %v588 = vld [vmem:[%s586 + $0x8] sm:$0xff]
    %v589 = vld [vmem:[%s586 + $0x10] sm:$0xff]
    %v590 = vld [vmem:[%s586 + $0x18] sm:$0xff]
    %v591 = vpack.c.bf16 %v584, %v582
    %v592 = vpack.c.bf16 %v588, %v587
    %v593 = vpack.c.bf16 %v590, %v589
    %v595 = vsel %vm257, %v591, 0
    %597 = vmatpush.bf16.msra.mxu0 0
    %598 = vmatpush.bf16.msra.mxu0 0
    %599 = vmatpush.bf16.msra.mxu0 0
    %600 = vmatpush.bf16.msra.mxu0 0
    %601 = vmatpush.bf16.msra.mxu0 0
    %602 = vmatpush.bf16.msra.mxu0 0
    %603 = vmatpush.bf16.msra.mxu0 %v593
    %604 = vmatpush.bf16.msra.mxu0 %v592
    %605 = vmatmul.bf16.gmra.mxu0 %v595
    %v606 = vpop.f32.mrf.mxu0
    %v607 = vadd.f32 0.0, %v606
    %v608 = vpop.f32.mrf.mxu0
    %v609 = vadd.f32 0.0, %v608
    %610 = vdwg.mxu0
    %v611 = vadd.f32 %v568, %v607
    %v612 = vadd.f32 %v570, %v609
    %613 = vmatpush.bf16.msra.mxu0 0
    %614 = vmatpush.bf16.msra.mxu0 0
    %615 = vmatpush.bf16.msra.mxu0 0
    %616 = vmatpush.bf16.msra.mxu0 0
    %617 = vmatpush.bf16.msra.mxu0 0
    %618 = vmatpush.bf16.msra.mxu0 0
    %619 = vmatpush.bf16.msra.mxu0 0
    %620 = vmatpush.bf16.msra.mxu0 %v591
    %621 = vmatmul.bf16.gmra.mxu0 %v517
    %v622 = vpop.f32.mrf.mxu0
    %v623 = vadd.f32 0.0, %v622
    %v624 = vpop.f32.mrf.mxu0
    %v625 = vadd.f32 0.0, %v624
    %626 = vdwg.mxu0
    %s627 = scalar_lea.vmem %s37, 96
    %v628 = vld [vmem:[%s627] sm:$0xff]
    %v629 = vld [vmem:[%s627 + $0x8] sm:$0xff]
    %v630 = vld [vmem:[%s627 + $0x10] sm:$0xff]
    %v631 = vld [vmem:[%s627 + $0x18] sm:$0xff]
    %v632 = vpack.c.bf16 %v625, %v623
    %v633 = vpack.c.bf16 %v629, %v628
    %v634 = vpack.c.bf16 %v631, %v630
    %v636 = vsel %vm257, %v632, 0
    %638 = vmatpush.bf16.msra.mxu0 0
    %639 = vmatpush.bf16.msra.mxu0 0
    %640 = vmatpush.bf16.msra.mxu0 0
    %641 = vmatpush.bf16.msra.mxu0 0
    %642 = vmatpush.bf16.msra.mxu0 0
    %643 = vmatpush.bf16.msra.mxu0 0
    %644 = vmatpush.bf16.msra.mxu0 %v634
    %645 = vmatpush.bf16.msra.mxu0 %v633
    %646 = vmatmul.bf16.gmra.mxu0 %v636
    %v647 = vpop.f32.mrf.mxu0
    %v648 = vadd.f32 0.0, %v647
    %v649 = vpop.f32.mrf.mxu0
    %v650 = vadd.f32 0.0, %v649
    %651 = vdwg.mxu0
    %v652 = vadd.f32 %v611, %v648
    %v653 = vadd.f32 %v612, %v650
    %v654 = vld [vmem:[#allocation8] sm:$0x1]
    %v656 = vperm.slane %v654, 0
    %v658 = vadd.f32 %v652, %v656
    %v659 = vadd.f32 %v653, %v656
    %v660 = vmul.f32 %v658, 0.5
    %v661 = vmul.f32 %v659, 0.5
    %v662 = vmul.f32 %v275, 0.5
    %v663 = vmul.f32 %v276, 0.5
    %v664 = vadd.f32 %v660, %v662
    %v665 = vadd.f32 %v661, %v663
    %v666 = vld [vmem:[%s41] sm:$0xff]
    %v667 = vld [vmem:[%s41 + $0x8] sm:$0xff]
    %v668 = vld [vmem:[%s41 + $0x10] sm:$0xff]
    %v669 = vld [vmem:[%s41 + $0x18] sm:$0xff]
    %v670 = vld [vmem:[%s41 + $0x20] sm:$0xff]
    %v671 = vld [vmem:[%s41 + $0x28] sm:$0xff]
    %v672 = vld [vmem:[%s41 + $0x30] sm:$0xff]
    %v673 = vld [vmem:[%s41 + $0x38] sm:$0xff]
    %v674 = vpack.c.bf16 %v665, %v664
    %v675 = vpack.c.bf16 %v667, %v666
    %v676 = vpack.c.bf16 %v669, %v668
    %v677 = vpack.c.bf16 %v671, %v670
    %v678 = vpack.c.bf16 %v673, %v672
    %679 = vmatpush.bf16.msra.mxu0 0
    %680 = vmatpush.bf16.msra.mxu0 0
    %681 = vmatpush.bf16.msra.mxu0 0
    %682 = vmatpush.bf16.msra.mxu0 0
    %683 = vmatpush.bf16.msra.mxu0 0
    %684 = vmatpush.bf16.msra.mxu0 0
    %685 = vmatpush.bf16.msra.mxu0 0
    %686 = vmatpush.bf16.msra.mxu0 %v674
    %687 = vmatmul.bf16.gmra.mxu0 %v517
    %v688 = vpop.f32.mrf.mxu0
    %v689 = vadd.f32 0.0, %v688
    %v690 = vpop.f32.mrf.mxu0
    %v691 = vadd.f32 0.0, %v690
    %692 = vdwg.mxu0
    %s693 = scalar_lea.vmem %s41, 64
    %v694 = vld [vmem:[%s693] sm:$0xff]
    %v695 = vld [vmem:[%s693 + $0x8] sm:$0xff]
    %v696 = vld [vmem:[%s693 + $0x10] sm:$0xff]
    %v697 = vld [vmem:[%s693 + $0x18] sm:$0xff]
    %v698 = vld [vmem:[%s693 + $0x20] sm:$0xff]
    %v699 = vld [vmem:[%s693 + $0x28] sm:$0xff]
    %v700 = vld [vmem:[%s693 + $0x30] sm:$0xff]
    %v701 = vld [vmem:[%s693 + $0x38] sm:$0xff]
    %v702 = vpack.c.bf16 %v691, %v689
    %v703 = vpack.c.bf16 %v695, %v694
    %v704 = vpack.c.bf16 %v697, %v696
    %v705 = vpack.c.bf16 %v699, %v698
    %v706 = vpack.c.bf16 %v701, %v700
    %v708 = vsel %vm294, %v702, 0
    %710 = vmatpush.bf16.msra.mxu0 0
    %711 = vmatpush.bf16.msra.mxu0 0
    %712 = vmatpush.bf16.msra.mxu0 0
    %713 = vmatpush.bf16.msra.mxu0 0
    %714 = vmatpush.bf16.msra.mxu0 %v706
    %715 = vmatpush.bf16.msra.mxu0 %v705
    %716 = vmatpush.bf16.msra.mxu0 %v704
    %717 = vmatpush.bf16.msra.mxu0 %v703
    %718 = vmatmul.bf16.gmra.mxu0 %v708
    %v719 = vpop.f32.mrf.mxu0
    %v720 = vadd.f32 0.0, %v719
    %v721 = vpop.f32.mrf.mxu0
    %v722 = vadd.f32 0.0, %v721
    %723 = vdwg.mxu0
    %v725 = vsel %vm294, %v674, 0
    %727 = vmatpush.bf16.msra.mxu0 0
    %728 = vmatpush.bf16.msra.mxu0 0
    %729 = vmatpush.bf16.msra.mxu0 0
    %730 = vmatpush.bf16.msra.mxu0 0
    %731 = vmatpush.bf16.msra.mxu0 %v678
    %732 = vmatpush.bf16.msra.mxu0 %v677
    %733 = vmatpush.bf16.msra.mxu0 %v676
    %734 = vmatpush.bf16.msra.mxu0 %v675
    %735 = vmatmul.bf16.gmra.mxu0 %v725
    %v736 = vpop.f32.mrf.mxu0
    %v737 = vadd.f32 %v720, %v736
    %v738 = vpop.f32.mrf.mxu0
    %v739 = vadd.f32 %v722, %v738
    %740 = vdwg.mxu0
    %741 = vmatpush.bf16.msra.mxu0 0
    %742 = vmatpush.bf16.msra.mxu0 0
    %743 = vmatpush.bf16.msra.mxu0 0
    %744 = vmatpush.bf16.msra.mxu0 0
    %745 = vmatpush.bf16.msra.mxu0 0
    %746 = vmatpush.bf16.msra.mxu0 0
    %747 = vmatpush.bf16.msra.mxu0 0
    %748 = vmatpush.bf16.msra.mxu0 %v702
    %749 = vmatmul.bf16.gmra.mxu0 %v517
    %v750 = vpop.f32.mrf.mxu0
    %v751 = vadd.f32 0.0, %v750
    %v752 = vpop.f32.mrf.mxu0
    %v753 = vadd.f32 0.0, %v752
    %754 = vdwg.mxu0
    %s755 = scalar_lea.vmem %s41, 128
    %v756 = vld [vmem:[%s755] sm:$0xff]
    %v757 = vld [vmem:[%s755 + $0x8] sm:$0xff]
    %v758 = vld [vmem:[%s755 + $0x10] sm:$0xff]
    %v759 = vld [vmem:[%s755 + $0x18] sm:$0xff]
    %v760 = vld [vmem:[%s755 + $0x20] sm:$0xff]
    %v761 = vld [vmem:[%s755 + $0x28] sm:$0xff]
    %v762 = vld [vmem:[%s755 + $0x30] sm:$0xff]
    %v763 = vld [vmem:[%s755 + $0x38] sm:$0xff]
    %v764 = vpack.c.bf16 %v753, %v751
    %v765 = vpack.c.bf16 %v757, %v756
    %v766 = vpack.c.bf16 %v759, %v758
    %v767 = vpack.c.bf16 %v761, %v760
    %v768 = vpack.c.bf16 %v763, %v762
    %v770 = vsel %vm294, %v764, 0
    %772 = vmatpush.bf16.msra.mxu0 0
    %773 = vmatpush.bf16.msra.mxu0 0
    %774 = vmatpush.bf16.msra.mxu0 0
    %775 = vmatpush.bf16.msra.mxu0 0
    %776 = vmatpush.bf16.msra.mxu0 %v768
    %777 = vmatpush.bf16.msra.mxu0 %v767
    %778 = vmatpush.bf16.msra.mxu0 %v766
    %779 = vmatpush.bf16.msra.mxu0 %v765
    %780 = vmatmul.bf16.gmra.mxu0 %v770
    %v781 = vpop.f32.mrf.mxu0
    %v782 = vadd.f32 0.0, %v781
    %v783 = vpop.f32.mrf.mxu0
    %v784 = vadd.f32 0.0, %v783
    %785 = vdwg.mxu0
    %v786 = vadd.f32 %v737, %v782
    %v787 = vadd.f32 %v739, %v784
    %788 = vmatpush.bf16.msra.mxu0 0
    %789 = vmatpush.bf16.msra.mxu0 0
    %790 = vmatpush.bf16.msra.mxu0 0
    %791 = vmatpush.bf16.msra.mxu0 0
    %792 = vmatpush.bf16.msra.mxu0 0
    %793 = vmatpush.bf16.msra.mxu0 0
    %794 = vmatpush.bf16.msra.mxu0 0
    %795 = vmatpush.bf16.msra.mxu0 %v764
    %796 = vmatmul.bf16.gmra.mxu0 %v517
    %v797 = vpop.f32.mrf.mxu0
    %v798 = vadd.f32 0.0, %v797
    %v799 = vpop.f32.mrf.mxu0
    %v800 = vadd.f32 0.0, %v799
    %801 = vdwg.mxu0
    %s802 = scalar_lea.vmem %s41, 192
    %v803 = vld [vmem:[%s802] sm:$0xff]
    %v804 = vld [vmem:[%s802 + $0x8] sm:$0xff]
    %v805 = vld [vmem:[%s802 + $0x10] sm:$0xff]
    %v806 = vld [vmem:[%s802 + $0x18] sm:$0xff]
    %v807 = vld [vmem:[%s802 + $0x20] sm:$0xff]
    %v808 = vld [vmem:[%s802 + $0x28] sm:$0xff]
    %v809 = vld [vmem:[%s802 + $0x30] sm:$0xff]
    %v810 = vld [vmem:[%s802 + $0x38] sm:$0xff]
    %v811 = vpack.c.bf16 %v800, %v798
    %v812 = vpack.c.bf16 %v804, %v803
    %v813 = vpack.c.bf16 %v806, %v805
    %v814 = vpack.c.bf16 %v808, %v807
    %v815 = vpack.c.bf16 %v810, %v809
    %v817 = vsel %vm294, %v811, 0
    %819 = vmatpush.bf16.msra.mxu0 0
    %820 = vmatpush.bf16.msra.mxu0 0
    %821 = vmatpush.bf16.msra.mxu0 0
    %822 = vmatpush.bf16.msra.mxu0 0
    %823 = vmatpush.bf16.msra.mxu0 %v815
    %824 = vmatpush.bf16.msra.mxu0 %v814
    %825 = vmatpush.bf16.msra.mxu0 %v813
    %826 = vmatpush.bf16.msra.mxu0 %v812
    %827 = vmatmul.bf16.gmra.mxu0 %v817
    %v828 = vpop.f32.mrf.mxu0
    %v829 = vadd.f32 0.0, %v828
    %v830 = vpop.f32.mrf.mxu0
    %v831 = vadd.f32 0.0, %v830
    %832 = vdwg.mxu0
    %v833 = vadd.f32 %v786, %v829
    %v834 = vadd.f32 %v787, %v831
    %v835 = vld [vmem:[#allocation10] sm:$0x1]
    %v837 = vperm.slane %v835, 0
    %v839 = vadd.f32 %v833, %v837
    %v840 = vadd.f32 %v834, %v837
    %v841 = vmul.f32 %v839, 0.5
    %v842 = vmul.f32 %v840, 0.5
    %v843 = vmul.f32 %v312, 0.5
    %v844 = vmul.f32 %v313, 0.5
    %v845 = vadd.f32 %v841, %v843
    %v846 = vadd.f32 %v842, %v844
    %v847 = vld [vmem:[%s45] sm:$0xff]
    %v848 = vld [vmem:[%s45 + $0x8] sm:$0xff]
    %v849 = vld [vmem:[%s45 + $0x10] sm:$0xff]
    %v850 = vld [vmem:[%s45 + $0x18] sm:$0xff]
    %v851 = vld [vmem:[%s45 + $0x20] sm:$0xff]
    %v852 = vld [vmem:[%s45 + $0x28] sm:$0xff]
    %v853 = vld [vmem:[%s45 + $0x30] sm:$0xff]
    %v854 = vld [vmem:[%s45 + $0x38] sm:$0xff]
    %v855 = vpack.c.bf16 %v846, %v845
    %v856 = vpack.c.bf16 %v848, %v847
    %v857 = vpack.c.bf16 %v850, %v849
    %v858 = vpack.c.bf16 %v852, %v851
    %v859 = vpack.c.bf16 %v854, %v853
    %s860 = scalar_lea.vmem %s45, 64
    %v861 = vld [vmem:[%s860] sm:$0xff]
    %v862 = vld [vmem:[%s860 + $0x8] sm:$0xff]
    %v863 = vld [vmem:[%s860 + $0x10] sm:$0xff]
    %v864 = vld [vmem:[%s860 + $0x18] sm:$0xff]
    %v865 = vld [vmem:[%s860 + $0x20] sm:$0xff]
    %v866 = vld [vmem:[%s860 + $0x28] sm:$0xff]
    %v867 = vld [vmem:[%s860 + $0x30] sm:$0xff]
    %v868 = vld [vmem:[%s860 + $0x38] sm:$0xff]
    %v869 = vpack.c.bf16 %v862, %v861
    %v870 = vpack.c.bf16 %v864, %v863
    %v871 = vpack.c.bf16 %v866, %v865
    %v872 = vpack.c.bf16 %v868, %v867
    %s873 = scalar_lea.vmem %s45, 128
    %v874 = vld [vmem:[%s873] sm:$0xff]
    %v875 = vld [vmem:[%s873 + $0x8] sm:$0xff]
    %v876 = vld [vmem:[%s873 + $0x10] sm:$0xff]
    %v877 = vld [vmem:[%s873 + $0x18] sm:$0xff]
    %v878 = vld [vmem:[%s873 + $0x20] sm:$0xff]
    %v879 = vld [vmem:[%s873 + $0x28] sm:$0xff]
    %v880 = vld [vmem:[%s873 + $0x30] sm:$0xff]
    %v881 = vld [vmem:[%s873 + $0x38] sm:$0xff]
    %v882 = vpack.c.bf16 %v875, %v874
    %v883 = vpack.c.bf16 %v877, %v876
    %v884 = vpack.c.bf16 %v879, %v878
    %v885 = vpack.c.bf16 %v881, %v880
    %s886 = scalar_lea.vmem %s45, 192
    %v887 = vld [vmem:[%s886] sm:$0xff]
    %v888 = vld [vmem:[%s886 + $0x8] sm:$0xff]
    %v889 = vld [vmem:[%s886 + $0x10] sm:$0xff]
    %v890 = vld [vmem:[%s886 + $0x18] sm:$0xff]
    %v891 = vld [vmem:[%s886 + $0x20] sm:$0xff]
    %v892 = vld [vmem:[%s886 + $0x28] sm:$0xff]
    %v893 = vld [vmem:[%s886 + $0x30] sm:$0xff]
    %v894 = vld [vmem:[%s886 + $0x38] sm:$0xff]
    %v895 = vpack.c.bf16 %v888, %v887
    %v896 = vpack.c.bf16 %v890, %v889
    %v897 = vpack.c.bf16 %v892, %v891
    %v898 = vpack.c.bf16 %v894, %v893
    %v900 = vsel %vm294, %v855, 0
    %902 = vmatpush.bf16.msra.mxu0 0
    %903 = vmatpush.bf16.msra.mxu0 0
    %904 = vmatpush.bf16.msra.mxu0 0
    %905 = vmatpush.bf16.msra.mxu0 0
    %906 = vmatpush.bf16.msra.mxu0 %v898
    %907 = vmatpush.bf16.msra.mxu0 %v897
    %908 = vmatpush.bf16.msra.mxu0 %v896
    %909 = vmatpush.bf16.msra.mxu0 %v895
    %910 = vmatmul.bf16.gmra.mxu0 %v900
    %v911 = vpop.f32.mrf.mxu0
    %v912 = vadd.f32 0.0, %v911
    %v913 = vpop.f32.mrf.mxu0
    %v914 = vadd.f32 0.0, %v913
    %915 = vdwg.mxu0
    %v916 = vpack.c.bf16 %v914, %v912
    %917 = vmatpush.bf16.msra.mxu0 0
    %918 = vmatpush.bf16.msra.mxu0 0
    %919 = vmatpush.bf16.msra.mxu0 0
    %920 = vmatpush.bf16.msra.mxu0 0
    %921 = vmatpush.bf16.msra.mxu0 0
    %922 = vmatpush.bf16.msra.mxu0 0
    %923 = vmatpush.bf16.msra.mxu0 0
    %924 = vmatpush.bf16.msra.mxu0 %v916
    %925 = vmatmul.bf16.gmra.mxu0 %v517
    %v926 = vpop.f32.mrf.mxu0
    %v927 = vadd.f32 0.0, %v926
    %v928 = vpop.f32.mrf.mxu0
    %v929 = vadd.f32 0.0, %v928
    %930 = vdwg.mxu0
    %931 = vmatpush.bf16.msra.mxu0 0
    %932 = vmatpush.bf16.msra.mxu0 0
    %933 = vmatpush.bf16.msra.mxu0 0
    %934 = vmatpush.bf16.msra.mxu0 0
    %935 = vmatpush.bf16.msra.mxu0 %v885
    %936 = vmatpush.bf16.msra.mxu0 %v884
    %937 = vmatpush.bf16.msra.mxu0 %v883
    %938 = vmatpush.bf16.msra.mxu0 %v882
    %939 = vmatmul.bf16.gmra.mxu0 %v900
    %v940 = vpop.f32.mrf.mxu0
    %v941 = vadd.f32 %v927, %v940
    %v942 = vpop.f32.mrf.mxu0
    %v943 = vadd.f32 %v929, %v942
    %944 = vdwg.mxu0
    %v945 = vpack.c.bf16 %v943, %v941
    %946 = vmatpush.bf16.msra.mxu0 0
    %947 = vmatpush.bf16.msra.mxu0 0
    %948 = vmatpush.bf16.msra.mxu0 0
    %949 = vmatpush.bf16.msra.mxu0 0
    %950 = vmatpush.bf16.msra.mxu0 0
    %951 = vmatpush.bf16.msra.mxu0 0
    %952 = vmatpush.bf16.msra.mxu0 0
    %953 = vmatpush.bf16.msra.mxu0 %v945
    %954 = vmatmul.bf16.gmra.mxu0 %v517
    %v955 = vpop.f32.mrf.mxu0
    %v956 = vadd.f32 0.0, %v955
    %v957 = vpop.f32.mrf.mxu0
    %v958 = vadd.f32 0.0, %v957
    %959 = vdwg.mxu0
    %960 = vmatpush.bf16.msra.mxu0 0
    %961 = vmatpush.bf16.msra.mxu0 0
    %962 = vmatpush.bf16.msra.mxu0 0
    %963 = vmatpush.bf16.msra.mxu0 0
    %964 = vmatpush.bf16.msra.mxu0 %v872
    %965 = vmatpush.bf16.msra.mxu0 %v871
    %966 = vmatpush.bf16.msra.mxu0 %v870
    %967 = vmatpush.bf16.msra.mxu0 %v869
    %968 = vmatmul.bf16.gmra.mxu0 %v900
    %v969 = vpop.f32.mrf.mxu0
    %v970 = vadd.f32 %v956, %v969
    %v971 = vpop.f32.mrf.mxu0
    %v972 = vadd.f32 %v958, %v971
    %973 = vdwg.mxu0
    %v974 = vpack.c.bf16 %v972, %v970
    %975 = vmatpush.bf16.msra.mxu0 0
    %976 = vmatpush.bf16.msra.mxu0 0
    %977 = vmatpush.bf16.msra.mxu0 0
    %978 = vmatpush.bf16.msra.mxu0 0
    %979 = vmatpush.bf16.msra.mxu0 0
    %980 = vmatpush.bf16.msra.mxu0 0
    %981 = vmatpush.bf16.msra.mxu0 0
    %982 = vmatpush.bf16.msra.mxu0 %v974
    %983 = vmatmul.bf16.gmra.mxu0 %v517
    %v984 = vpop.f32.mrf.mxu0
    %v985 = vadd.f32 0.0, %v984
    %v986 = vpop.f32.mrf.mxu0
    %v987 = vadd.f32 0.0, %v986
    %988 = vdwg.mxu0
    %989 = vmatpush.bf16.msra.mxu0 0
    %990 = vmatpush.bf16.msra.mxu0 0
    %991 = vmatpush.bf16.msra.mxu0 0
    %992 = vmatpush.bf16.msra.mxu0 0
    %993 = vmatpush.bf16.msra.mxu0 %v859
    %994 = vmatpush.bf16.msra.mxu0 %v858
    %995 = vmatpush.bf16.msra.mxu0 %v857
    %996 = vmatpush.bf16.msra.mxu0 %v856
    %997 = vmatmul.bf16.gmra.mxu0 %v900
    %v998 = vpop.f32.mrf.mxu0
    %v999 = vadd.f32 %v985, %v998
    %v1000 = vpop.f32.mrf.mxu0
    %v1001 = vadd.f32 %v987, %v1000
    %1002 = vdwg.mxu0
    %v1003 = vld [vmem:[#allocation11] sm:$0x1]
    %v1005 = vperm.slane %v1003, 0
    %v1007 = vadd.f32 %v999, %v1005
    %v1008 = vadd.f32 %v1001, %v1005
    %v1009 = vmul.f32 %v1007, 0.5
    %v1010 = vmul.f32 %v1008, 0.5
    %v1011 = vmul.f32 %v348, 0.5
    %v1012 = vmul.f32 %v349, 0.5
    %v1013 = vadd.f32 %v1009, %v1011
    %v1014 = vadd.f32 %v1010, %v1012
    %v1015 = vld [vmem:[%s49] sm:$0xff]
    %v1016 = vld [vmem:[%s49 + $0x8] sm:$0xff]
    %v1017 = vld [vmem:[%s49 + $0x10] sm:$0xff]
    %v1018 = vld [vmem:[%s49 + $0x18] sm:$0xff]
    %v1019 = vpack.c.bf16 %v1014, %v1013
    %v1020 = vpack.c.bf16 %v1016, %v1015
    %v1021 = vpack.c.bf16 %v1018, %v1017
    %s1022 = scalar_lea.vmem %s49, 32
    %v1023 = vld [vmem:[%s1022] sm:$0xff]
    %v1024 = vld [vmem:[%s1022 + $0x8] sm:$0xff]
    %v1025 = vld [vmem:[%s1022 + $0x10] sm:$0xff]
    %v1026 = vld [vmem:[%s1022 + $0x18] sm:$0xff]
    %v1027 = vpack.c.bf16 %v1024, %v1023
    %v1028 = vpack.c.bf16 %v1026, %v1025
    %s1029 = scalar_lea.vmem %s49, 64
    %v1030 = vld [vmem:[%s1029] sm:$0xff]
    %v1031 = vld [vmem:[%s1029 + $0x8] sm:$0xff]
    %v1032 = vld [vmem:[%s1029 + $0x10] sm:$0xff]
    %v1033 = vld [vmem:[%s1029 + $0x18] sm:$0xff]
    %v1034 = vpack.c.bf16 %v1031, %v1030
    %v1035 = vpack.c.bf16 %v1033, %v1032
    %s1036 = scalar_lea.vmem %s49, 96
    %v1037 = vld [vmem:[%s1036] sm:$0xff]
    %v1038 = vld [vmem:[%s1036 + $0x8] sm:$0xff]
    %v1039 = vld [vmem:[%s1036 + $0x10] sm:$0xff]
    %v1040 = vld [vmem:[%s1036 + $0x18] sm:$0xff]
    %v1041 = vpack.c.bf16 %v1038, %v1037
    %v1042 = vpack.c.bf16 %v1040, %v1039
    %v1044 = vsel %vm257, %v1019, 0
    %1046 = vmatpush.bf16.msra.mxu0 0
    %1047 = vmatpush.bf16.msra.mxu0 0
    %1048 = vmatpush.bf16.msra.mxu0 0
    %1049 = vmatpush.bf16.msra.mxu0 0
    %1050 = vmatpush.bf16.msra.mxu0 0
    %1051 = vmatpush.bf16.msra.mxu0 0
    %1052 = vmatpush.bf16.msra.mxu0 %v1042
    %1053 = vmatpush.bf16.msra.mxu0 %v1041
    %1054 = vmatmul.bf16.gmra.mxu0 %v1044
    %v1055 = vpop.f32.mrf.mxu0
    %v1056 = vadd.f32 0.0, %v1055
    %v1057 = vpop.f32.mrf.mxu0
    %v1058 = vadd.f32 0.0, %v1057
    %1059 = vdwg.mxu0
    %v1060 = vpack.c.bf16 %v1058, %v1056
    %1061 = vmatpush.bf16.msra.mxu0 0
    %1062 = vmatpush.bf16.msra.mxu0 0
    %1063 = vmatpush.bf16.msra.mxu0 0
    %1064 = vmatpush.bf16.msra.mxu0 0
    %1065 = vmatpush.bf16.msra.mxu0 0
    %1066 = vmatpush.bf16.msra.mxu0 0
    %1067 = vmatpush.bf16.msra.mxu0 0
    %1068 = vmatpush.bf16.msra.mxu0 %v1060
    %1069 = vmatmul.bf16.gmra.mxu0 %v517
    %v1070 = vpop.f32.mrf.mxu0
    %v1071 = vadd.f32 0.0, %v1070
    %v1072 = vpop.f32.mrf.mxu0
    %v1073 = vadd.f32 0.0, %v1072
    %1074 = vdwg.mxu0
    %1075 = vmatpush.bf16.msra.mxu0 0
    %1076 = vmatpush.bf16.msra.mxu0 0
    %1077 = vmatpush.bf16.msra.mxu0 0
    %1078 = vmatpush.bf16.msra.mxu0 0
    %1079 = vmatpush.bf16.msra.mxu0 0
    %1080 = vmatpush.bf16.msra.mxu0 0
    %1081 = vmatpush.bf16.msra.mxu0 %v1035
    %1082 = vmatpush.bf16.msra.mxu0 %v1034
    %1083 = vmatmul.bf16.gmra.mxu0 %v1044
    %v1084 = vpop.f32.mrf.mxu0
    %v1085 = vadd.f32 %v1071, %v1084
    %v1086 = vpop.f32.mrf.mxu0
    %v1087 = vadd.f32 %v1073, %v1086
    %1088 = vdwg.mxu0
    %v1089 = vpack.c.bf16 %v1087, %v1085
    %1090 = vmatpush.bf16.msra.mxu0 0
    %1091 = vmatpush.bf16.msra.mxu0 0
    %1092 = vmatpush.bf16.msra.mxu0 0
    %1093 = vmatpush.bf16.msra.mxu0 0
    %1094 = vmatpush.bf16.msra.mxu0 0
    %1095 = vmatpush.bf16.msra.mxu0 0
    %1096 = vmatpush.bf16.msra.mxu0 0
    %1097 = vmatpush.bf16.msra.mxu0 %v1089
    %1098 = vmatmul.bf16.gmra.mxu0 %v517
    %v1099 = vpop.f32.mrf.mxu0
    %v1100 = vadd.f32 0.0, %v1099
    %v1101 = vpop.f32.mrf.mxu0
    %v1102 = vadd.f32 0.0, %v1101
    %1103 = vdwg.mxu0
    %1104 = vmatpush.bf16.msra.mxu0 0
    %1105 = vmatpush.bf16.msra.mxu0 0
    %1106 = vmatpush.bf16.msra.mxu0 0
    %1107 = vmatpush.bf16.msra.mxu0 0
    %1108 = vmatpush.bf16.msra.mxu0 0
    %1109 = vmatpush.bf16.msra.mxu0 0
    %1110 = vmatpush.bf16.msra.mxu0 %v1028
    %1111 = vmatpush.bf16.msra.mxu0 %v1027
    %1112 = vmatmul.bf16.gmra.mxu0 %v1044
    %v1113 = vpop.f32.mrf.mxu0
    %v1114 = vadd.f32 %v1100, %v1113
    %v1115 = vpop.f32.mrf.mxu0
    %v1116 = vadd.f32 %v1102, %v1115
    %1117 = vdwg.mxu0
    %v1118 = vpack.c.bf16 %v1116, %v1114
    %1119 = vmatpush.bf16.msra.mxu0 0
    %1120 = vmatpush.bf16.msra.mxu0 0
    %1121 = vmatpush.bf16.msra.mxu0 0
    %1122 = vmatpush.bf16.msra.mxu0 0
    %1123 = vmatpush.bf16.msra.mxu0 0
    %1124 = vmatpush.bf16.msra.mxu0 0
    %1125 = vmatpush.bf16.msra.mxu0 0
    %1126 = vmatpush.bf16.msra.mxu0 %v1118
    %1127 = vmatmul.bf16.gmra.mxu0 %v517
    %v1128 = vpop.f32.mrf.mxu0
    %v1129 = vadd.f32 0.0, %v1128
    %v1130 = vpop.f32.mrf.mxu0
    %v1131 = vadd.f32 0.0, %v1130
    %1132 = vdwg.mxu0
    %1133 = vmatpush.bf16.msra.mxu0 0
    %1134 = vmatpush.bf16.msra.mxu0 0
    %1135 = vmatpush.bf16.msra.mxu0 0
    %1136 = vmatpush.bf16.msra.mxu0 0
    %1137 = vmatpush.bf16.msra.mxu0 0
    %1138 = vmatpush.bf16.msra.mxu0 0
    %1139 = vmatpush.bf16.msra.mxu0 %v1021
    %1140 = vmatpush.bf16.msra.mxu0 %v1020
    %1141 = vmatmul.bf16.gmra.mxu0 %v1044
    %v1142 = vpop.f32.mrf.mxu0
    %v1143 = vadd.f32 %v1129, %v1142
    %v1144 = vpop.f32.mrf.mxu0
    %v1145 = vadd.f32 %v1131, %v1144
    %1146 = vdwg.mxu0
    %v1147 = vld [vmem:[#allocation13] sm:$0x1]
    %v1149 = vperm.slane %v1147, 0
    %v1151 = vadd.f32 %v1143, %v1149
    %v1152 = vadd.f32 %v1145, %v1149
    %v1153 = vmul.f32 %v1151, 0.5
    %v1154 = vmul.f32 %v1152, 0.5
    %v1155 = vmul.f32 %v374, 0.5
    %v1156 = vmul.f32 %v376, 0.5
    %v1157 = vadd.f32 %v1153, %v1155
    %v1158 = vadd.f32 %v1154, %v1156
    %v1159 = vld [vmem:[%s53] sm:$0xff]
    %v1160 = vld [vmem:[%s53 + $0x8] sm:$0xff]
    %v1161 = vpack.c.bf16 %v1158, %v1157
    %v1162 = vpack.c.bf16 %v1160, %v1159
    %s1163 = scalar_lea.vmem %s53, 16
    %v1164 = vld [vmem:[%s1163] sm:$0xff]
    %v1165 = vld [vmem:[%s1163 + $0x8] sm:$0xff]
    %v1166 = vpack.c.bf16 %v1165, %v1164
    %s1167 = scalar_lea.vmem %s53, 32
    %v1168 = vld [vmem:[%s1167] sm:$0xff]
    %v1169 = vld [vmem:[%s1167 + $0x8] sm:$0xff]
    %v1170 = vpack.c.bf16 %v1169, %v1168
    %s1171 = scalar_lea.vmem %s53, 48
    %v1172 = vld [vmem:[%s1171] sm:$0xff]
    %v1173 = vld [vmem:[%s1171 + $0x8] sm:$0xff]
    %v1174 = vpack.c.bf16 %v1173, %v1172
    %v1176 = vsel %vm386, %v1161, 0
    %1178 = vmatpush.bf16.msra.mxu0 0
    %1179 = vmatpush.bf16.msra.mxu0 0
    %1180 = vmatpush.bf16.msra.mxu0 0
    %1181 = vmatpush.bf16.msra.mxu0 0
    %1182 = vmatpush.bf16.msra.mxu0 0
    %1183 = vmatpush.bf16.msra.mxu0 0
    %1184 = vmatpush.bf16.msra.mxu0 0
    %1185 = vmatpush.bf16.msra.mxu0 %v1174
    %1186 = vmatmul.bf16.gmra.mxu0 %v1176
    %v1187 = vpop.f32.mrf.mxu0
    %v1188 = vadd.f32 0.0, %v1187
    %v1189 = vpop.f32.mrf.mxu0
    %v1190 = vadd.f32 0.0, %v1189
    %1191 = vdwg.mxu0
    %v1192 = vpack.c.bf16 %v1190, %v1188
    %1193 = vmatpush.bf16.msra.mxu0 0
    %1194 = vmatpush.bf16.msra.mxu0 0
    %1195 = vmatpush.bf16.msra.mxu0 0
    %1196 = vmatpush.bf16.msra.mxu0 0
    %1197 = vmatpush.bf16.msra.mxu0 0
    %1198 = vmatpush.bf16.msra.mxu0 0
    %1199 = vmatpush.bf16.msra.mxu0 0
    %1200 = vmatpush.bf16.msra.mxu0 %v1192
    %1201 = vmatmul.bf16.gmra.mxu0 %v517
    %v1202 = vpop.f32.mrf.mxu0
    %v1203 = vadd.f32 0.0, %v1202
    %v1204 = vpop.f32.mrf.mxu0
    %v1205 = vadd.f32 0.0, %v1204
    %1206 = vdwg.mxu0
    %1207 = vmatpush.bf16.msra.mxu0 0
    %1208 = vmatpush.bf16.msra.mxu0 0
    %1209 = vmatpush.bf16.msra.mxu0 0
    %1210 = vmatpush.bf16.msra.mxu0 0
    %1211 = vmatpush.bf16.msra.mxu0 0
    %1212 = vmatpush.bf16.msra.mxu0 0
    %1213 = vmatpush.bf16.msra.mxu0 0
    %1214 = vmatpush.bf16.msra.mxu0 %v1170
    %1215 = vmatmul.bf16.gmra.mxu0 %v1176
    %v1216 = vpop.f32.mrf.mxu0
    %v1217 = vadd.f32 %v1203, %v1216
    %v1218 = vpop.f32.mrf.mxu0
    %v1219 = vadd.f32 %v1205, %v1218
    %1220 = vdwg.mxu0
    %v1221 = vpack.c.bf16 %v1219, %v1217
    %1222 = vmatpush.bf16.msra.mxu0 0
    %1223 = vmatpush.bf16.msra.mxu0 0
    %1224 = vmatpush.bf16.msra.mxu0 0
    %1225 = vmatpush.bf16.msra.mxu0 0
    %1226 = vmatpush.bf16.msra.mxu0 0
    %1227 = vmatpush.bf16.msra.mxu0 0
    %1228 = vmatpush.bf16.msra.mxu0 0
    %1229 = vmatpush.bf16.msra.mxu0 %v1221
    %1230 = vmatmul.bf16.gmra.mxu0 %v517
    %v1231 = vpop.f32.mrf.mxu0
    %v1232 = vadd.f32 0.0, %v1231
    %v1233 = vpop.f32.mrf.mxu0
    %v1234 = vadd.f32 0.0, %v1233
    %1235 = vdwg.mxu0
    %1236 = vmatpush.bf16.msra.mxu0 0
    %1237 = vmatpush.bf16.msra.mxu0 0
    %1238 = vmatpush.bf16.msra.mxu0 0
    %1239 = vmatpush.bf16.msra.mxu0 0
    %1240 = vmatpush.bf16.msra.mxu0 0
    %1241 = vmatpush.bf16.msra.mxu0 0
    %1242 = vmatpush.bf16.msra.mxu0 0
    %1243 = vmatpush.bf16.msra.mxu0 %v1166
    %1244 = vmatmul.bf16.gmra.mxu0 %v1176
    %v1245 = vpop.f32.mrf.mxu0
    %v1246 = vadd.f32 %v1232, %v1245
    %v1247 = vpop.f32.mrf.mxu0
    %v1248 = vadd.f32 %v1234, %v1247
    %1249 = vdwg.mxu0
    %v1250 = vpack.c.bf16 %v1248, %v1246
    %1251 = vmatpush.bf16.msra.mxu0 0
    %1252 = vmatpush.bf16.msra.mxu0 0
    %1253 = vmatpush.bf16.msra.mxu0 0
    %1254 = vmatpush.bf16.msra.mxu0 0
    %1255 = vmatpush.bf16.msra.mxu0 0
    %1256 = vmatpush.bf16.msra.mxu0 0
    %1257 = vmatpush.bf16.msra.mxu0 0
    %1258 = vmatpush.bf16.msra.mxu0 %v1250
    %1259 = vmatmul.bf16.gmra.mxu0 %v517
    %v1260 = vpop.f32.mrf.mxu0
    %v1261 = vadd.f32 0.0, %v1260
    %v1262 = vpop.f32.mrf.mxu0
    %v1263 = vadd.f32 0.0, %v1262
    %1264 = vdwg.mxu0
    %1265 = vmatpush.bf16.msra.mxu0 0
    %1266 = vmatpush.bf16.msra.mxu0 0
    %1267 = vmatpush.bf16.msra.mxu0 0
    %1268 = vmatpush.bf16.msra.mxu0 0
    %1269 = vmatpush.bf16.msra.mxu0 0
    %1270 = vmatpush.bf16.msra.mxu0 0
    %1271 = vmatpush.bf16.msra.mxu0 0
    %1272 = vmatpush.bf16.msra.mxu0 %v1162
    %1273 = vmatmul.bf16.gmra.mxu0 %v1176
    %v1274 = vpop.f32.mrf.mxu0
    %v1275 = vadd.f32 %v1261, %v1274
    %v1276 = vpop.f32.mrf.mxu0
    %v1277 = vadd.f32 %v1263, %v1276
    %1278 = vdwg.mxu0
    %v1279 = vld [vmem:[#allocation14] sm:$0x1]
    %v1281 = vperm.slane %v1279, 0
    %v1283 = vadd.f32 %v1275, %v1281
    %v1284 = vadd.f32 %v1277, %v1281
    %vm1285 = vcmask 31744
    %v1286 = vsel %vm1285, %v1283, -inf
    %1287 = vmax.xlane.f32.xlu0 %v1286
    %v1288 = vpop.xlane.xlu0 %1287
    %v1289 = vsel %vm1285, %v1284, -inf
    %1290 = vmax.xlane.f32.xlu0 %v1289
    %v1291 = vpop.xlane.xlu0 %1290
    %v1292 = vsub.f32 %v1283, %v1288
    %v1293 = vsub.f32 %v1284, %v1291
    %v1294 = vmul.f32 %v1292, 1.442695
    %v1295 = vpow.pop %v1294
    %v1296 = vmul.f32 %v1293, 1.442695
    %v1297 = vpow.pop %v1296
    %v1298 = vsel %vm1285, %v1295, 0.0
    %1299 = vadd.xlane.f32.xlu0 %v1298
    %v1300 = vpop.xlane.xlu0 %1299
    %v1301 = vsel %vm1285, %v1297, 0.0
    %1302 = vadd.xlane.f32.xlu0 %v1301
    %v1303 = vpop.xlane.xlu0 %1302
    %v1304 = vrcp.pop %v1300
    %v1305 = vrcp.pop %v1303
    %v1306 = vmul.f32 %v1295, %v1304
    %v1307 = vmul.f32 %v1297, %v1305
    %1308 = vst.msk [vmem:[%s63] sm:$0xff] %vm1285, %v1306
    %1309 = vst.msk [vmem:[%s63 + $0x8] sm:$0xff] %vm1285, %v1307
    %v1310 = vld [vmem:[%s57] sm:$0xf]
    %v1311 = vpack.c.bf16 %v1310, %v1310
    %v1313 = vsel %vm386, %v1311, 0
    %1315 = vmatpush.bf16.xpose.msra.mxu0 0
    %1316 = vmatpush.bf16.xpose.msra.mxu0 0
    %1317 = vmatpush.bf16.xpose.msra.mxu0 0
    %1318 = vmatpush.bf16.xpose.msra.mxu0 0
    %1319 = vmatpush.bf16.xpose.msra.mxu0 0
    %1320 = vmatpush.bf16.xpose.msra.mxu0 0
    %1321 = vmatpush.bf16.xpose.msra.mxu0 0
    %1322 = vmatpush.bf16.xpose.msra.mxu0 %v1313
    %1323 = vmatmul.bf16.gmra.mxu0 %v388
    %v1324 = vpop.f32.mrf.mxu0
    %v1325 = vadd.f32 0.0, %v1324
    %v1326 = vpop.f32.mrf.mxu0
    %v1327 = vadd.f32 0.0, %v1326
    %1328 = vdwg.mxu0
    %v1329 = vmul.f32 %v374, %v374
    %v1330 = vmul.f32 %v376, %v376
    %v1331 = vsel %vm386, %v1329, 0.0
    %1332 = vadd.xlane.f32.xlu0 %v1331
    %v1333 = vpop.xlane.xlu0 %1332
    %v1334 = vsel %vm386, %v1330, 0.0
    %1335 = vadd.xlane.f32.xlu0 %v1334
    %v1336 = vpop.xlane.xlu0 %1335
    %v1337 = vmul.f32 %v1310, %v1310
    %v1339 = vsel %vm386, 1.0, 0
    %v1342 = vsel %vm386, %v1337, 0
    %1344 = vmatpush.xpose.msra.mxu0 0.0
    %1345 = vmatpush.xpose.msra.mxu0 0.0
    %1346 = vmatpush.xpose.msra.mxu0 0.0
    %1347 = vmatpush.xpose.msra.mxu0 0.0
    %1348 = vmatpush.xpose.msra.mxu0 0.0
    %1349 = vmatpush.xpose.msra.mxu0 0.0
    %1350 = vmatpush.xpose.msra.mxu0 0.0
    %1351 = vmatpush.xpose.msra.mxu0 0.0
    %1352 = vmatpush.xpose.msra.mxu0 0.0
    %1353 = vmatpush.xpose.msra.mxu0 0.0
    %1354 = vmatpush.xpose.msra.mxu0 0.0
    %1355 = vmatpush.xpose.msra.mxu0 0.0
    %1356 = vmatpush.xpose.msra.mxu0 0.0
    %1357 = vmatpush.xpose.msra.mxu0 0.0
    %1358 = vmatpush.xpose.msra.mxu0 0.0
    %1359 = vmatpush.xpose.msra.mxu0 %v1342
    %1360 = vmatmul.f32.gmra.mxu0 %v1339
    %v1361 = vpop.f32.mrf.mxu0
    %v1362 = vadd.f32 0.0, %v1361
    %1363 = vdwg.mxu0
    %v1364 = vperm.slane %v1362, 0
    %v1365 = vadd.f32 %v1333, %v1364
    %v1366 = vadd.f32 %v1336, %v1364
    %v1367 = vmul.f32 %v1325, 2.0
    %v1368 = vmul.f32 %v1327, 2.0
    %v1369 = vsub.f32 %v1365, %v1367
    %v1370 = vsub.f32 %v1366, %v1368
    %v1371 = vmax.f32 %v1369, 0.0
    %v1372 = vmax.f32 %v1370, 0.0
    %v1373 = vadd.f32 %v1371, 1.0
    %v1374 = vadd.f32 %v1372, 1.0
    %v1375 = vrcp.pop %v1373
    %v1376 = vmul.f32 %v1373, %v1375
    %v1377 = vsub.f32 1.0, %v1376
    %v1378 = vmul.f32 %v1375, %v1377
    %v1379 = vadd.f32 %v1375, %v1378
    %vm1380 = vweird.f32 %v1373
    %vm1381 = vweird.f32 %v1375
    %vm1382 = vmor %vm1380, %vm1381
    %v1383 = vsel %vm1382, %v1375, %v1379
    %v1384 = vand.u32 2147483647, %v1373
    %vm1385 = vcmp.eq.f32.partialorder %v1384, 8.507059e+37
    %v1386 = vand.u32 %v1373, 2147483648
    %v1387 = vor.u32 1.1754944e-38, %v1386
    %v1388 = vsel %vm1385, %v1387, %v1383
    %v1389 = vmul.f32 1.0, %v1388
    %v1390 = vrcp.pop %v1374
    %v1391 = vmul.f32 %v1374, %v1390
    %v1392 = vsub.f32 1.0, %v1391
    %v1393 = vmul.f32 %v1390, %v1392
    %v1394 = vadd.f32 %v1390, %v1393
    %vm1395 = vweird.f32 %v1374
    %vm1396 = vweird.f32 %v1390
    %vm1397 = vmor %vm1395, %vm1396
    %v1398 = vsel %vm1397, %v1390, %v1394
    %v1399 = vand.u32 2147483647, %v1374
    %vm1400 = vcmp.eq.f32.partialorder %v1399, 8.507059e+37
    %v1401 = vand.u32 %v1374, 2147483648
    %v1402 = vor.u32 1.1754944e-38, %v1401
    %v1403 = vsel %vm1400, %v1402, %v1398
    %v1404 = vmul.f32 1.0, %v1403
    %v1405 = vsel %vm1285, %v1389, 0.0
    %1406 = vadd.xlane.f32.xlu0 %v1405
    %v1407 = vpop.xlane.xlu0 %1406
    %v1408 = vsel %vm1285, %v1404, 0.0
    %1409 = vadd.xlane.f32.xlu0 %v1408
    %v1410 = vpop.xlane.xlu0 %1409
    %v1411 = vrcp.pop %v1407
    %v1412 = vrcp.pop %v1410
    %v1413 = vmul.f32 %v1389, %v1411
    %v1414 = vmul.f32 %v1404, %v1412
    %1415 = vst.msk [vmem:[%s61] sm:$0xff] %vm1285, %v1413
    %1416 = vst.msk [vmem:[%s61 + $0x8] sm:$0xff] %vm1285, %v1414
    // Predicated region
    $region150: #{dcmbs_forward.1} parent=1 // pred_check
      _
    $region151: #{dcmbs_forward.1} parent=1 // pred_check_branch
      %1418 = sbr.rel (0) target = $region153
    $region152: #{dcmbs_forward.1} parent=1 // pred_region
      %1420 = vsyncadd [#allocation4], 0
      %s1421 = sshll.u32 [#allocation16], 4
      %s1422 = int_to_ptr.vmem [resolvable:$true] %s1421
      %s1423 = sshll.u32 %s59, 4
      %s1424 = int_to_ptr.hbm [resolvable:$true] %s1423
      %1429 = dma.vmem_to_hbm [thread:$0]  %s1422, 256, %s1424, [#allocation4], 128, 128, 8
    $region153: #{dcmbs_forward.1} parent=1 // pred_fallthru
      _
    // Predicated region
    $region154: #{dcmbs_forward.1} parent=1 // pred_check
      _
    $region155: #{dcmbs_forward.1} parent=1 // pred_check_branch
      %1431 = sbr.rel (0) target = $region157
    $region156: #{dcmbs_forward.1} parent=1 // pred_region
      _
    $region157: #{dcmbs_forward.1} parent=1 // pred_fallthru
      _
    // Predicated region
    $region158: #{dcmbs_forward.1} parent=1 // pred_check
      _
    $region159: #{dcmbs_forward.1} parent=1 // pred_check_branch
      %1433 = sbr.rel (0) target = $region161
    $region160: #{dcmbs_forward.1} parent=1 // pred_region
      _
    $region161: #{dcmbs_forward.1} parent=1 // pred_fallthru
      _
    // Predicated region
    $region162: #{dcmbs_forward.1} parent=1 // pred_check
      _
    $region163: #{dcmbs_forward.1} parent=1 // pred_check_branch
      %1435 = sbr.rel (0) target = $region165
    $region164: #{dcmbs_forward.1} parent=1 // pred_region
      %1437 = vsyncadd [#allocation18], 0
      %s1438 = sshll.u32 [#allocation17], 4
      %s1439 = int_to_ptr.vmem [resolvable:$true] %s1438
      %s1440 = sshll.u32 %s65, 4
      %s1441 = int_to_ptr.hbm [resolvable:$true] %s1440
      %1446 = dma.vmem_to_hbm [thread:$0]  %s1439, 256, %s1441, [#allocation18], 128, 128, 8
    $region165: #{dcmbs_forward.1} parent=1 // pred_fallthru
      _
    // Predicated region
    $region166: #{dcmbs_forward.1} parent=1 // pred_check
      _
    $region167: #{dcmbs_forward.1} parent=1 // pred_check_branch
      %1448 = sbr.rel (0) target = $region169
    $region168: #{dcmbs_forward.1} parent=1 // pred_region
      %1450 = dma.done [#allocation4], 256
    $region169: #{dcmbs_forward.1} parent=1 // pred_fallthru
      _
    // Predicated region
    $region170: #{dcmbs_forward.1} parent=1 // pred_check
      _
    $region171: #{dcmbs_forward.1} parent=1 // pred_check_branch
      %1452 = sbr.rel (0) target = $region173
    $region172: #{dcmbs_forward.1} parent=1 // pred_region
      _
    $region173: #{dcmbs_forward.1} parent=1 // pred_fallthru
      _
    // Predicated region
    $region174: #{dcmbs_forward.1} parent=1 // pred_check
      _
    $region175: #{dcmbs_forward.1} parent=1 // pred_check_branch
      %1454 = sbr.rel (0) target = $region177
    $region176: #{dcmbs_forward.1} parent=1 // pred_region
      _
    $region177: #{dcmbs_forward.1} parent=1 // pred_fallthru
      _
    // Predicated region
    $region178: #{dcmbs_forward.1} parent=1 // pred_check
      _
    $region179: #{dcmbs_forward.1} parent=1 // pred_check_branch
      %1456 = sbr.rel (0) target = $region181
    $region180: #{dcmbs_forward.1} parent=1 // pred_region
      %1458 = dma.done [#allocation18], 256
    $region181: #{dcmbs_forward.1} parent=1 // pred_fallthru
      _
    %1459 = vsyncpa [#allocation3], 1
    %1460 = vsyncpa [#allocation6], 1
    %1461 = vsyncpa [#allocation9], 1
    %1462 = vsyncpa [#allocation12], 1
    %1463 = vsyncpa [#allocation15], 1
    %1464 = vsyncpa [#allocation4], 1
    %1465 = vsyncpa [#allocation18], 1

</llo_original>
